<compile_context>
chip_gen: v6e
topology: v6e:2x2x1
jax: 0.10.0
libtpu: 0.0.40
codegen_flags: <defaults>
</compile_context>

<pallas_src>
import math

import jax
import jax.numpy as jnp
from jax.experimental import pallas as pl
from jax.experimental.pallas import tpu as pltpu

EPS = 1e-5


def _double_conv_kernel(x_ref,
                        w1b_ref, bias1_ref, g1_ref, be1_ref, sel1_ref, exp1_ref,
                        w2b_ref, bias2_ref, g2_ref, be2_ref, sel2_ref, exp2_ref,
                        o_ref, xs_ref, ys_ref):
    """All refs live in VMEM.

    x_ref    : (N, H, W*Cin)          bf16 lane-packed input (channel fastest)
    w1b_ref  : (3*W*Cin, W*Cmid)      bf16 K-stacked conv1 band weights
    bias1_ref: (1, W*Cmid)            f32 conv1 bias tiled over W
    g1/be1   : (1, Cmid)              f32 BN1 gamma / beta
    sel1_ref : (W*Cmid, Cmid)         f32 lane -> channel selector (stats)
    exp1_ref : (Cmid, W*Cmid)         f32 channel -> lane expander (scale/shift)
    w2b/bias2/g2/be2/sel2/exp2        same for conv2 / BN2
    o_ref    : (N*H, W*Cout)          f32 lane-dense output slab
    xs_ref   : (N, H+2, W*Cin)        bf16 scratch: x with zero H-halo rows
    ys_ref   : (N, H+2, W*Cmid)       bf16 scratch: y with zero H-halo rows
    """
    N, H, WCin = x_ref.shape
    WCmid = w1b_ref.shape[1]
    Cmid = g1_ref.shape[1]
    M = N * H
    W = WCmid // Cmid
    inv_cnt = 1.0 / float(N * H * W)

    def bn_relu(acc, g_ref, be_ref, sel_ref, exp_ref):
        # Training-mode BatchNorm (batch stats, biased variance) + ReLU.
        # Single pass; stats / scale+shift kept in f32.  The per-channel
        # gather and broadcast are each ONE tiny batched MXU matmul.
        stats = jnp.concatenate(
            [jnp.sum(acc, axis=0, keepdims=True),
             jnp.sum(acc * acc, axis=0, keepdims=True)], axis=0)       # (2, W*C)
        red = jnp.dot(stats, sel_ref[...],
                      preferred_element_type=jnp.float32)              # (2, C)
        mean = red[0:1, :] * inv_cnt                                   # (1, C)
        var = jnp.maximum(red[1:2, :] * inv_cnt - mean * mean, 0.0)    # biased
        scale = g_ref[...] * jax.lax.rsqrt(var + EPS)                  # (1, C)
        shift = be_ref[...] - mean * scale                             # (1, C)
        ss = jnp.concatenate([scale, shift], axis=0)                   # (2, C)
        ssw = jnp.dot(ss, exp_ref[...],
                      preferred_element_type=jnp.float32)              # (2, W*C)
        return jnp.maximum(acc * ssw[0:1, :] + ssw[1:2, :], 0.0)

    # ---- stage x with zero H-halo rows (only the 2 halo rows are zeroed) ----
    xs_ref[:, 0:1, :] = jnp.zeros((N, 1, WCin), jnp.bfloat16)
    xs_ref[:, H + 1:H + 2, :] = jnp.zeros((N, 1, WCin), jnp.bfloat16)
    xs_ref[:, 1:H + 1, :] = x_ref[...]

    # ---- conv1: ONE K-stacked bf16 GEMM (K = 3*W*Cin), f32 accumulation ----
    lhs1 = jnp.concatenate(
        [xs_ref[:, 0:H, :].reshape(M, WCin),
         xs_ref[:, 1:H + 1, :].reshape(M, WCin),
         xs_ref[:, 2:H + 2, :].reshape(M, WCin)], axis=-1)             # (M, 3*W*Cin)
    acc1 = bias1_ref[...] + jnp.dot(lhs1, w1b_ref[...],
                                    preferred_element_type=jnp.float32)
    y = bn_relu(acc1, g1_ref, be1_ref, sel1_ref, exp1_ref)             # (M, W*Cmid) f32

    # ---- stage y halo; reuse the live value as conv2's ky=1 K-segment ----
    y_bf = y.astype(jnp.bfloat16)
    ys_ref[:, 0:1, :] = jnp.zeros((N, 1, WCmid), jnp.bfloat16)
    ys_ref[:, H + 1:H + 2, :] = jnp.zeros((N, 1, WCmid), jnp.bfloat16)
    ys_ref[:, 1:H + 1, :] = y_bf.reshape(N, H, WCmid)

    # ---- conv2: ONE K-stacked bf16 GEMM (K = 3*W*Cmid), f32 accumulation ----
    lhs2 = jnp.concatenate(
        [ys_ref[:, 0:H, :].reshape(M, WCmid),
         y_bf,
         ys_ref[:, 2:H + 2, :].reshape(M, WCmid)], axis=-1)            # (M, 3*W*Cmid)
    acc2 = bias2_ref[...] + jnp.dot(lhs2, w2b_ref[...],
                                    preferred_element_type=jnp.float32)
    o_ref[...] = bn_relu(acc2, g2_ref, be2_ref, sel2_ref, exp2_ref)


def _conv_band(w_oihw, ky, W):
    """(Cout, Cin, 3, 3) -> (W*Cin, W*Cout) band matrix for kernel row ky.

    band[jp*Cin + ci, j*Cout + co] = w[co, ci, ky, jp - j + 1] when |jp-j| <= 1,
    else 0.  Encodes the kx taps AND the W-edge zero padding in the weights.
    """
    Cout, Cin = w_oihw.shape[0], w_oihw.shape[1]
    wk = w_oihw[:, :, ky, :]                              # (Cout, Cin, 3)
    jp = jnp.arange(W)[:, None, None, None]
    ci = jnp.arange(Cin)[None, :, None, None]
    j = jnp.arange(W)[None, None, :, None]
    co = jnp.arange(Cout)[None, None, None, :]
    kx = jp - j + 1
    valid = (kx >= 0) & (kx <= 2)
    vals = jnp.where(valid, wk[co, ci, jnp.clip(kx, 0, 2)], 0.0)
    return vals.reshape(W * Cin, W * Cout)


def _double_conv_packed(xp, w1_oihw, b1, g1, be1, w2_oihw, b2, g2, be2):
    """Lane-packed DoubleConv core.

    xp: (N, H, W*Cin_p) bf16 lane-packed (channel fastest), Cin already padded.
    Returns (N*H, W*Cout) f32 lane-packed output slab.
    """
    N, H, WCin = xp.shape
    Cmid = w1_oihw.shape[0]
    Cout = w2_oihw.shape[0]
    Cin_p = WCin // (WCin // w1_oihw.shape[1]) if False else w1_oihw.shape[1]
    W = WCin // Cin_p

    # K-stacked banded GEMM weights (kx taps + W-edge padding folded in), bf16.
    w1b = jnp.concatenate([_conv_band(w1_oihw, ky, W) for ky in range(3)],
                          axis=0).astype(jnp.bfloat16)     # (3*W*Cin_p, W*Cmid)
    w2b = jnp.concatenate([_conv_band(w2_oihw, ky, W) for ky in range(3)],
                          axis=0).astype(jnp.bfloat16)     # (3*W*Cmid, W*Cout)

    bias1 = jnp.tile(b1, W)[None, :]                       # (1, W*Cmid) f32
    bias2 = jnp.tile(b2, W)[None, :]                       # (1, W*Cout) f32
    eye_m = jnp.eye(Cmid, dtype=jnp.float32)
    eye_o = jnp.eye(Cout, dtype=jnp.float32)
    sel1 = jnp.tile(eye_m, (W, 1))                         # (W*Cmid, Cmid)
    exp1 = jnp.tile(eye_m, (1, W))                         # (Cmid, W*Cmid)
    sel2 = jnp.tile(eye_o, (W, 1))                         # (W*Cout, Cout)
    exp2 = jnp.tile(eye_o, (1, W))                         # (Cout, W*Cout)

    vmem = pl.BlockSpec(memory_space=pltpu.MemorySpace.VMEM)
    return pl.pallas_call(
        _double_conv_kernel,
        out_shape=jax.ShapeDtypeStruct((N * H, W * Cout), jnp.float32),
        in_specs=[vmem] * 13,
        out_specs=vmem,
        scratch_shapes=[pltpu.VMEM((N, H + 2, W * Cin_p), jnp.bfloat16),
                        pltpu.VMEM((N, H + 2, W * Cmid), jnp.bfloat16)],
        compiler_params=pltpu.CompilerParams(
            vmem_limit_bytes=32 * 1024 * 1024),
    )(xp, w1b, bias1, g1[None, :], be1[None, :], sel1, exp1,
      w2b, bias2, g2[None, :], be2[None, :], sel2, exp2)


@jax.jit
def double_conv(x_nchw, w1_oihw, b1, g1, be1, w2_oihw, b2, g2, be2):
    """Pallas DoubleConv.  x_nchw: (N, Cin, H, W) float32 -> (N, Cout, H, W)."""
    N, Cin, H, W = x_nchw.shape
    Cout = w2_oihw.shape[0]

    # Pad Cin so W*Cin is a multiple of 128: lane-dense (unmasked) loads and
    # lane-tile-aligned K-stacking.  Padded channels are zero, so semantics
    # are unchanged.
    if (W * Cin) % 128 != 0:
        lane_mult = 128 // math.gcd(W, 128)
        Cin_p = ((Cin + lane_mult - 1) // lane_mult) * lane_mult
    else:
        Cin_p = Cin
    x_pad = jnp.pad(x_nchw, ((0, 0), (0, Cin_p - Cin), (0, 0), (0, 0)))
    w1_pad = jnp.pad(w1_oihw, ((0, 0), (0, Cin_p - Cin), (0, 0), (0, 0)))

    # lane-packed layout: row (n, i) -> length-(W*C) lane vector, channel fastest
    xp = jnp.transpose(x_pad, (0, 2, 3, 1)).reshape(N, H, W * Cin_p)
    xp = xp.astype(jnp.bfloat16)

    out = _double_conv_packed(xp, w1_pad, b1, g1, be1, w2_oihw, b2, g2, be2)

    # (N*H, W*Cout) lane-packed -> NCHW
    return jnp.transpose(out.reshape(N, H, W, Cout), (0, 3, 1, 2))


def _reference(x_nchw, w1_oihw, b1, g1, be1, w2_oihw, b2, g2, be2):
    """Plain-JAX f32 reference matching PyTorch training-mode forward."""
    def conv(x, w, b):
        y = jax.lax.conv_general_dilated(
            x, w, window_strides=(1, 1), padding="SAME",
            dimension_numbers=("NCHW", "OIHW", "NCHW"))
        return y + b[None, :, None, None]

    def bn_relu(y, g, be):
        mean = jnp.mean(y, axis=(0, 2, 3), keepdims=True)
        var = jnp.mean((y - mean) ** 2, axis=(0, 2, 3), keepdims=True)
        y = (y - mean) * jax.lax.rsqrt(var + EPS)
        y = y * g[None, :, None, None] + be[None, :, None, None]
        return jnp.maximum(y, 0.0)

    y = bn_relu(conv(x_nchw, w1_oihw, b1), g1, be1)
    return bn_relu(conv(y, w2_oihw, b2), g2, be2)


if __name__ == "__main__":
    # DoubleConv(in_channels=4, out_channels=8)  (mid_channels defaults to 8)
    N, Cin, H, W = 2, 4, 16, 16
    Cmid, Cout = 8, 8

    key = jax.random.PRNGKey(0)
    k_x, k_w1, k_b1, k_w2, k_b2 = jax.random.split(key, 5)

    x = jax.random.normal(k_x, (N, Cin, H, W), jnp.float32)

    # deterministic synthetic parameters (conv weights/bias random, BN at defaults)
    w1 = 0.2 * jax.random.normal(k_w1, (Cmid, Cin, 3, 3), jnp.float32)
    b1 = 0.1 * jax.random.normal(k_b1, (Cmid,), jnp.float32)
    g1 = jnp.ones((Cmid,), jnp.float32)    # BatchNorm2d default weight
    be1 = jnp.zeros((Cmid,), jnp.float32)  # BatchNorm2d default bias

    w2 = 0.2 * jax.random.normal(k_w2, (Cout, Cmid, 3, 3), jnp.float32)
    b2 = 0.1 * jax.random.normal(k_b2, (Cout,), jnp.float32)
    g2 = jnp.ones((Cout,), jnp.float32)
    be2 = jnp.zeros((Cout,), jnp.float32)

    out = double_conv(x, w1, b1, g1, be1, w2, b2, g2, be2)
    out = jax.block_until_ready(out)

    ref = jax.block_until_ready(_reference(x, w1, b1, g1, be1, w2, b2, g2, be2))
    assert out.shape == (N, Cout, H, W)
    # Tolerance deliberately loosened vs the f32 reference: GEMM operands are
    # bf16 (f32 accumulation) per the performance review.
    assert jnp.allclose(out, ref, rtol=5e-2, atol=5e-2), (
        float(jnp.max(jnp.abs(out - ref))))

    print("KERNEL_OK")
</pallas_src>

<mosaic_0001>
module attributes {stable_mosaic.version = 11 : i64} {
  func.func @_double_conv_kernel(%arg0: memref<2x16x128xbf16, #tpu.memory_space<vmem>>, %arg1: memref<384x128xbf16, #tpu.memory_space<vmem>>, %arg2: memref<1x128xf32, #tpu.memory_space<vmem>>, %arg3: memref<1x8xf32, #tpu.memory_space<vmem>>, %arg4: memref<1x8xf32, #tpu.memory_space<vmem>>, %arg5: memref<128x8xf32, #tpu.memory_space<vmem>>, %arg6: memref<8x128xf32, #tpu.memory_space<vmem>>, %arg7: memref<384x128xbf16, #tpu.memory_space<vmem>>, %arg8: memref<1x128xf32, #tpu.memory_space<vmem>>, %arg9: memref<1x8xf32, #tpu.memory_space<vmem>>, %arg10: memref<1x8xf32, #tpu.memory_space<vmem>>, %arg11: memref<128x8xf32, #tpu.memory_space<vmem>>, %arg12: memref<8x128xf32, #tpu.memory_space<vmem>>, %arg13: memref<32x128xf32, #tpu.memory_space<vmem>>, %arg14: memref<2x18x128xbf16, #tpu.memory_space<vmem>>, %arg15: memref<2x18x128xbf16, #tpu.memory_space<vmem>>) attributes {dimension_semantics = [], scalar_prefetch = 0 : i64, scratch_operands = 2 : i64, tpu.core_type = #tpu.core_type<tc>} {
    %cst = arith.constant 0.000000e+00 : bf16
    %0 = vector.broadcast %cst : bf16 to vector<2x1x128xbf16>
    %c0 = arith.constant 0 : index
    %c0_0 = arith.constant 0 : index
    %c0_1 = arith.constant 0 : index
    %1 = vector.load %arg14[%c0, %c0_0, %c0_1] : memref<2x18x128xbf16, #tpu.memory_space<vmem>>, vector<2x1x128xbf16>
    tpu.vector_store %arg14[%c0, %c0_0, %c0_1], %0 {strides = array<i32>} : memref<2x18x128xbf16, #tpu.memory_space<vmem>>, vector<2x1x128xbf16>,
    %cst_2 = arith.constant 0.000000e+00 : bf16
    %2 = vector.broadcast %cst_2 : bf16 to vector<2x1x128xbf16>
    %c0_3 = arith.constant 0 : index
    %c17 = arith.constant 17 : index
    %c0_4 = arith.constant 0 : index
    %3 = vector.load %arg14[%c0_3, %c17, %c0_4] : memref<2x18x128xbf16, #tpu.memory_space<vmem>>, vector<2x1x128xbf16>
    tpu.vector_store %arg14[%c0_3, %c17, %c0_4], %2 {strides = array<i32>} : memref<2x18x128xbf16, #tpu.memory_space<vmem>>, vector<2x1x128xbf16>,
    %c0_5 = arith.constant 0 : index
    %c0_6 = arith.constant 0 : index
    %c0_7 = arith.constant 0 : index
    %4 = vector.load %arg0[%c0_5, %c0_6, %c0_7] : memref<2x16x128xbf16, #tpu.memory_space<vmem>>, vector<2x16x128xbf16>
    %c0_8 = arith.constant 0 : index
    %c1 = arith.constant 1 : index
    %c0_9 = arith.constant 0 : index
    %5 = vector.load %arg14[%c0_8, %c1, %c0_9] : memref<2x18x128xbf16, #tpu.memory_space<vmem>>, vector<2x16x128xbf16>
    tpu.vector_store %arg14[%c0_8, %c1, %c0_9], %4 {strides = array<i32>} : memref<2x18x128xbf16, #tpu.memory_space<vmem>>, vector<2x16x128xbf16>,
    %c0_10 = arith.constant 0 : index
    %c0_11 = arith.constant 0 : index
    %c0_12 = arith.constant 0 : index
    %6 = vector.load %arg14[%c0_10, %c0_11, %c0_12] : memref<2x18x128xbf16, #tpu.memory_space<vmem>>, vector<2x16x128xbf16>
    %7 = vector.shape_cast %6 : vector<2x16x128xbf16> to vector<32x128xbf16>
    %c0_13 = arith.constant 0 : index
    %c1_14 = arith.constant 1 : index
    %c0_15 = arith.constant 0 : index
    %8 = vector.load %arg14[%c0_13, %c1_14, %c0_15] : memref<2x18x128xbf16, #tpu.memory_space<vmem>>, vector<2x16x128xbf16>
    %9 = vector.shape_cast %8 : vector<2x16x128xbf16> to vector<32x128xbf16>
    %c0_16 = arith.constant 0 : index
    %c2 = arith.constant 2 : index
    %c0_17 = arith.constant 0 : index
    %10 = vector.load %arg14[%c0_16, %c2, %c0_17] : memref<2x18x128xbf16, #tpu.memory_space<vmem>>, vector<2x16x128xbf16>
    %11 = vector.shape_cast %10 : vector<2x16x128xbf16> to vector<32x128xbf16>
    %12 = tpu.concatenate %7, %9, %11 in 1 : vector<32x128xbf16>, vector<32x128xbf16>, vector<32x128xbf16> -> vector<32x384xbf16>
    %c0_18 = arith.constant 0 : index
    %c0_19 = arith.constant 0 : index
    %13 = vector.load %arg2[%c0_18, %c0_19] : memref<1x128xf32, #tpu.memory_space<vmem>>, vector<1x128xf32>
    %c0_20 = arith.constant 0 : index
    %c0_21 = arith.constant 0 : index
    %14 = vector.load %arg1[%c0_20, %c0_21] : memref<384x128xbf16, #tpu.memory_space<vmem>>, vector<384x128xbf16>
    %cst_22 = arith.constant dense<0.000000e+00> : vector<32x128xf32>
    %15 = tpu.matmul %12, %14, %cst_22 {dimension_numbers = #tpu.dot_dimension_numbers<[1], [0], [0], [1], [0, 0, 1, 1], [], []>} : vector<32x384xbf16>, vector<384x128xbf16>, vector<32x128xf32> -> vector<32x128xf32>
    %16 = vector.broadcast %13 : vector<1x128xf32> to vector<32x128xf32>
    %17 = arith.addf %16, %15 : vector<32x128xf32>
    %cst_23 = arith.constant dense<0.000000e+00> : vector<128xf32>
    %18 = vector.multi_reduction <add>, %17, %cst_23 [0] : vector<32x128xf32> to vector<128xf32>
    %19 = vector.shape_cast %18 : vector<128xf32> to vector<1x128xf32>
    %20 = arith.mulf %17, %17 : vector<32x128xf32>
    %cst_24 = arith.constant dense<0.000000e+00> : vector<128xf32>
    %21 = vector.multi_reduction <add>, %20, %cst_24 [0] : vector<32x128xf32> to vector<128xf32>
    %22 = vector.shape_cast %21 : vector<128xf32> to vector<1x128xf32>
    %23 = tpu.concatenate %19, %22 in 0 : vector<1x128xf32>, vector<1x128xf32> -> vector<2x128xf32>
    %c0_25 = arith.constant 0 : index
    %c0_26 = arith.constant 0 : index
    %24 = vector.load %arg5[%c0_25, %c0_26] : memref<128x8xf32, #tpu.memory_space<vmem>>, vector<128x8xf32>
    %cst_27 = arith.constant dense<0.000000e+00> : vector<2x8xf32>
    %25 = tpu.matmul %23, %24, %cst_27 {dimension_numbers = #tpu.dot_dimension_numbers<[1], [0], [0], [1], [0, 0, 1, 1], [], []>} : vector<2x128xf32>, vector<128x8xf32>, vector<2x8xf32> -> vector<2x8xf32>
    %26 = vector.extract_strided_slice %25 {offsets = [0, 0], sizes = [1, 8], strides = [1, 1]} : vector<2x8xf32> to vector<1x8xf32>
    %cst_28 = arith.constant 0.001953125 : f32
    %27 = vector.broadcast %cst_28 : f32 to vector<1x8xf32>
    %28 = arith.mulf %26, %27 : vector<1x8xf32>
    %29 = vector.extract_strided_slice %25 {offsets = [1, 0], sizes = [1, 8], strides = [1, 1]} : vector<2x8xf32> to vector<1x8xf32>
    %cst_29 = arith.constant 0.001953125 : f32
    %30 = vector.broadcast %cst_29 : f32 to vector<1x8xf32>
    %31 = arith.mulf %29, %30 : vector<1x8xf32>
    %32 = arith.mulf %28, %28 : vector<1x8xf32>
    %33 = arith.subf %31, %32 : vector<1x8xf32>
    %cst_30 = arith.constant 0.000000e+00 : f32
    %34 = vector.broadcast %cst_30 : f32 to vector<1x8xf32>
    %35 = arith.maximumf %33, %34 : vector<1x8xf32>
    %c0_31 = arith.constant 0 : index
    %c0_32 = arith.constant 0 : index
    %36 = vector.load %arg3[%c0_31, %c0_32] : memref<1x8xf32, #tpu.memory_space<vmem>>, vector<1x8xf32>
    %cst_33 = arith.constant 9.99999974E-6 : f32
    %37 = vector.broadcast %cst_33 : f32 to vector<1x8xf32>
    %38 = arith.addf %35, %37 : vector<1x8xf32>
    %39 = math.rsqrt %38 : vector<1x8xf32>
    %40 = arith.mulf %36, %39 : vector<1x8xf32>
    %c0_34 = arith.constant 0 : index
    %c0_35 = arith.constant 0 : index
    %41 = vector.load %arg4[%c0_34, %c0_35] : memref<1x8xf32, #tpu.memory_space<vmem>>, vector<1x8xf32>
    %42 = arith.mulf %28, %40 : vector<1x8xf32>
    %43 = arith.subf %41, %42 : vector<1x8xf32>
    %44 = tpu.concatenate %40, %43 in 0 : vector<1x8xf32>, vector<1x8xf32> -> vector<2x8xf32>
    %c0_36 = arith.constant 0 : index
    %c0_37 = arith.constant 0 : index
    %45 = vector.load %arg6[%c0_36, %c0_37] : memref<8x128xf32, #tpu.memory_space<vmem>>, vector<8x128xf32>
    %cst_38 = arith.constant dense<0.000000e+00> : vector<2x128xf32>
    %46 = tpu.matmul %44, %45, %cst_38 {dimension_numbers = #tpu.dot_dimension_numbers<[1], [0], [0], [1], [0, 0, 1, 1], [], []>} : vector<2x8xf32>, vector<8x128xf32>, vector<2x128xf32> -> vector<2x128xf32>
    %47 = vector.extract_strided_slice %46 {offsets = [0, 0], sizes = [1, 128], strides = [1, 1]} : vector<2x128xf32> to vector<1x128xf32>
    %48 = vector.broadcast %47 : vector<1x128xf32> to vector<32x128xf32>
    %49 = arith.mulf %17, %48 : vector<32x128xf32>
    %50 = vector.extract_strided_slice %46 {offsets = [1, 0], sizes = [1, 128], strides = [1, 1]} : vector<2x128xf32> to vector<1x128xf32>
    %51 = vector.broadcast %50 : vector<1x128xf32> to vector<32x128xf32>
    %52 = arith.addf %49, %51 : vector<32x128xf32>
    %cst_39 = arith.constant 0.000000e+00 : f32
    %53 = vector.broadcast %cst_39 : f32 to vector<32x128xf32>
    %54 = arith.maximumf %52, %53 : vector<32x128xf32>
    %55 = arith.truncf %54 : vector<32x128xf32> to vector<32x128xbf16>
    %cst_40 = arith.constant 0.000000e+00 : bf16
    %56 = vector.broadcast %cst_40 : bf16 to vector<2x1x128xbf16>
    %c0_41 = arith.constant 0 : index
    %c0_42 = arith.constant 0 : index
    %c0_43 = arith.constant 0 : index
    %57 = vector.load %arg15[%c0_41, %c0_42, %c0_43] : memref<2x18x128xbf16, #tpu.memory_space<vmem>>, vector<2x1x128xbf16>
    tpu.vector_store %arg15[%c0_41, %c0_42, %c0_43], %56 {strides = array<i32>} : memref<2x18x128xbf16, #tpu.memory_space<vmem>>, vector<2x1x128xbf16>,
    %cst_44 = arith.constant 0.000000e+00 : bf16
    %58 = vector.broadcast %cst_44 : bf16 to vector<2x1x128xbf16>
    %c0_45 = arith.constant 0 : index
    %c17_46 = arith.constant 17 : index
    %c0_47 = arith.constant 0 : index
    %59 = vector.load %arg15[%c0_45, %c17_46, %c0_47] : memref<2x18x128xbf16, #tpu.memory_space<vmem>>, vector<2x1x128xbf16>
    tpu.vector_store %arg15[%c0_45, %c17_46, %c0_47], %58 {strides = array<i32>} : memref<2x18x128xbf16, #tpu.memory_space<vmem>>, vector<2x1x128xbf16>,
    %60 = vector.shape_cast %55 : vector<32x128xbf16> to vector<2x16x128xbf16>
    %c0_48 = arith.constant 0 : index
    %c1_49 = arith.constant 1 : index
    %c0_50 = arith.constant 0 : index
    %61 = vector.load %arg15[%c0_48, %c1_49, %c0_50] : memref<2x18x128xbf16, #tpu.memory_space<vmem>>, vector<2x16x128xbf16>
    tpu.vector_store %arg15[%c0_48, %c1_49, %c0_50], %60 {strides = array<i32>} : memref<2x18x128xbf16, #tpu.memory_space<vmem>>, vector<2x16x128xbf16>,
    %c0_51 = arith.constant 0 : index
    %c0_52 = arith.constant 0 : index
    %c0_53 = arith.constant 0 : index
    %62 = vector.load %arg15[%c0_51, %c0_52, %c0_53] : memref<2x18x128xbf16, #tpu.memory_space<vmem>>, vector<2x16x128xbf16>
    %63 = vector.shape_cast %62 : vector<2x16x128xbf16> to vector<32x128xbf16>
    %c0_54 = arith.constant 0 : index
    %c2_55 = arith.constant 2 : index
    %c0_56 = arith.constant 0 : index
    %64 = vector.load %arg15[%c0_54, %c2_55, %c0_56] : memref<2x18x128xbf16, #tpu.memory_space<vmem>>, vector<2x16x128xbf16>
    %65 = vector.shape_cast %64 : vector<2x16x128xbf16> to vector<32x128xbf16>
    %66 = tpu.concatenate %63, %55, %65 in 1 : vector<32x128xbf16>, vector<32x128xbf16>, vector<32x128xbf16> -> vector<32x384xbf16>
    %c0_57 = arith.constant 0 : index
    %c0_58 = arith.constant 0 : index
    %67 = vector.load %arg8[%c0_57, %c0_58] : memref<1x128xf32, #tpu.memory_space<vmem>>, vector<1x128xf32>
    %c0_59 = arith.constant 0 : index
    %c0_60 = arith.constant 0 : index
    %68 = vector.load %arg7[%c0_59, %c0_60] : memref<384x128xbf16, #tpu.memory_space<vmem>>, vector<384x128xbf16>
    %cst_61 = arith.constant dense<0.000000e+00> : vector<32x128xf32>
    %69 = tpu.matmul %66, %68, %cst_61 {dimension_numbers = #tpu.dot_dimension_numbers<[1], [0], [0], [1], [0, 0, 1, 1], [], []>} : vector<32x384xbf16>, vector<384x128xbf16>, vector<32x128xf32> -> vector<32x128xf32>
    %70 = vector.broadcast %67 : vector<1x128xf32> to vector<32x128xf32>
    %71 = arith.addf %70, %69 : vector<32x128xf32>
    %cst_62 = arith.constant dense<0.000000e+00> : vector<128xf32>
    %72 = vector.multi_reduction <add>, %71, %cst_62 [0] : vector<32x128xf32> to vector<128xf32>
    %73 = vector.shape_cast %72 : vector<128xf32> to vector<1x128xf32>
    %74 = arith.mulf %71, %71 : vector<32x128xf32>
    %cst_63 = arith.constant dense<0.000000e+00> : vector<128xf32>
    %75 = vector.multi_reduction <add>, %74, %cst_63 [0] : vector<32x128xf32> to vector<128xf32>
    %76 = vector.shape_cast %75 : vector<128xf32> to vector<1x128xf32>
    %77 = tpu.concatenate %73, %76 in 0 : vector<1x128xf32>, vector<1x128xf32> -> vector<2x128xf32>
    %c0_64 = arith.constant 0 : index
    %c0_65 = arith.constant 0 : index
    %78 = vector.load %arg11[%c0_64, %c0_65] : memref<128x8xf32, #tpu.memory_space<vmem>>, vector<128x8xf32>
    %cst_66 = arith.constant dense<0.000000e+00> : vector<2x8xf32>
    %79 = tpu.matmul %77, %78, %cst_66 {dimension_numbers = #tpu.dot_dimension_numbers<[1], [0], [0], [1], [0, 0, 1, 1], [], []>} : vector<2x128xf32>, vector<128x8xf32>, vector<2x8xf32> -> vector<2x8xf32>
    %80 = vector.extract_strided_slice %79 {offsets = [0, 0], sizes = [1, 8], strides = [1, 1]} : vector<2x8xf32> to vector<1x8xf32>
    %cst_67 = arith.constant 0.001953125 : f32
    %81 = vector.broadcast %cst_67 : f32 to vector<1x8xf32>
    %82 = arith.mulf %80, %81 : vector<1x8xf32>
    %83 = vector.extract_strided_slice %79 {offsets = [1, 0], sizes = [1, 8], strides = [1, 1]} : vector<2x8xf32> to vector<1x8xf32>
    %cst_68 = arith.constant 0.001953125 : f32
    %84 = vector.broadcast %cst_68 : f32 to vector<1x8xf32>
    %85 = arith.mulf %83, %84 : vector<1x8xf32>
    %86 = arith.mulf %82, %82 : vector<1x8xf32>
    %87 = arith.subf %85, %86 : vector<1x8xf32>
    %cst_69 = arith.constant 0.000000e+00 : f32
    %88 = vector.broadcast %cst_69 : f32 to vector<1x8xf32>
    %89 = arith.maximumf %87, %88 : vector<1x8xf32>
    %c0_70 = arith.constant 0 : index
    %c0_71 = arith.constant 0 : index
    %90 = vector.load %arg9[%c0_70, %c0_71] : memref<1x8xf32, #tpu.memory_space<vmem>>, vector<1x8xf32>
    %cst_72 = arith.constant 9.99999974E-6 : f32
    %91 = vector.broadcast %cst_72 : f32 to vector<1x8xf32>
    %92 = arith.addf %89, %91 : vector<1x8xf32>
    %93 = math.rsqrt %92 : vector<1x8xf32>
    %94 = arith.mulf %90, %93 : vector<1x8xf32>
    %c0_73 = arith.constant 0 : index
    %c0_74 = arith.constant 0 : index
    %95 = vector.load %arg10[%c0_73, %c0_74] : memref<1x8xf32, #tpu.memory_space<vmem>>, vector<1x8xf32>
    %96 = arith.mulf %82, %94 : vector<1x8xf32>
    %97 = arith.subf %95, %96 : vector<1x8xf32>
    %98 = tpu.concatenate %94, %97 in 0 : vector<1x8xf32>, vector<1x8xf32> -> vector<2x8xf32>
    %c0_75 = arith.constant 0 : index
    %c0_76 = arith.constant 0 : index
    %99 = vector.load %arg12[%c0_75, %c0_76] : memref<8x128xf32, #tpu.memory_space<vmem>>, vector<8x128xf32>
    %cst_77 = arith.constant dense<0.000000e+00> : vector<2x128xf32>
    %100 = tpu.matmul %98, %99, %cst_77 {dimension_numbers = #tpu.dot_dimension_numbers<[1], [0], [0], [1], [0, 0, 1, 1], [], []>} : vector<2x8xf32>, vector<8x128xf32>, vector<2x128xf32> -> vector<2x128xf32>
    %101 = vector.extract_strided_slice %100 {offsets = [0, 0], sizes = [1, 128], strides = [1, 1]} : vector<2x128xf32> to vector<1x128xf32>
    %102 = vector.broadcast %101 : vector<1x128xf32> to vector<32x128xf32>
    %103 = arith.mulf %71, %102 : vector<32x128xf32>
    %104 = vector.extract_strided_slice %100 {offsets = [1, 0], sizes = [1, 128], strides = [1, 1]} : vector<2x128xf32> to vector<1x128xf32>
    %105 = vector.broadcast %104 : vector<1x128xf32> to vector<32x128xf32>
    %106 = arith.addf %103, %105 : vector<32x128xf32>
    %cst_78 = arith.constant 0.000000e+00 : f32
    %107 = vector.broadcast %cst_78 : f32 to vector<32x128xf32>
    %108 = arith.maximumf %106, %107 : vector<32x128xf32>
    %c0_79 = arith.constant 0 : index
    %c0_80 = arith.constant 0 : index
    %109 = vector.load %arg13[%c0_79, %c0_80] : memref<32x128xf32, #tpu.memory_space<vmem>>, vector<32x128xf32>
    tpu.vector_store %arg13[%c0_79, %c0_80], %108 {strides = array<i32>} : memref<32x128xf32, #tpu.memory_space<vmem>>, vector<32x128xf32>,
    return
  }
}

</mosaic_0001>

<llo_original>
// kernel: tile.49
$region0: #{tile.49}
  %s0 = inlined_call_operand.vmem [shape: f32[8,16,8], index: 0, kind: input, shape index: {}]
  %s1 = inlined_call_operand.vmem [shape: f32[8,128], index: 1, kind: output, shape index: {}]
  %s2 = smov 3
  %v3 = vld [vmem:[%s0] ss:$16 sm:%s2]
  %s4 = smov 12
  %v5 = vld [vmem:[%s0] ss:$16 sm:%s4]
  %vm6 = vcmask 1043458
  %v7 = vsel %vm6, %v5, %v3
  %s8 = smov 48
  %v9 = vld [vmem:[%s0] ss:$16 sm:%s8]
  %vm10 = vcmask 1045508
  %v11 = vsel %vm10, %v9, %v7
  %s12 = smov 192
  %v13 = vld [vmem:[%s0] ss:$16 sm:%s12]
  %vm14 = vcmask 1047558
  %v15 = vsel %vm14, %v13, %v11
  %vm16 = vcmask 64512
  %17 = vst.msk [vmem:[%s1] sm:$0xff] %vm16, %v15
  %s18 = scalar_lea.vmem %s0, 15
  %s19 = smov 3
  %v20 = vld [vmem:[%s18] ss:$16 sm:%s19]
  %s21 = scalar_lea.vmem %s0, 15
  %s22 = smov 12
  %v23 = vld [vmem:[%s21] ss:$16 sm:%s22]
  %vm24 = vcmask 1043458
  %v25 = vsel %vm24, %v23, %v20
  %s26 = scalar_lea.vmem %s0, 15
  %s27 = smov 48
  %v28 = vld [vmem:[%s26] ss:$16 sm:%s27]
  %vm29 = vcmask 1045508
  %v30 = vsel %vm29, %v28, %v25
  %s31 = scalar_lea.vmem %s0, 15
  %s32 = smov 192
  %v33 = vld [vmem:[%s31] ss:$16 sm:%s32]
  %vm34 = vcmask 1047558
  %v35 = vsel %vm34, %v33, %v30
  %36 = vrot.lane.b32.xlu0 %v35, 120
  %v37 = vpop.permute.xlu0 %36
  %vm38 = vcmask 1048512
  %39 = vst.msk [vmem:[%s1] sm:$0xff] %vm38, %v37
  %s40 = scalar_lea.vmem %s0, 14
  %s41 = smov 3
  %v42 = vld [vmem:[%s40] ss:$16 sm:%s41]
  %s43 = scalar_lea.vmem %s0, 14
  %s44 = smov 12
  %v45 = vld [vmem:[%s43] ss:$16 sm:%s44]
  %vm46 = vcmask 1043458
  %v47 = vsel %vm46, %v45, %v42
  %s48 = scalar_lea.vmem %s0, 14
  %s49 = smov 48
  %v50 = vld [vmem:[%s48] ss:$16 sm:%s49]
  %vm51 = vcmask 1045508
  %v52 = vsel %vm51, %v50, %v47
  %s53 = scalar_lea.vmem %s0, 14
  %s54 = smov 192
  %v55 = vld [vmem:[%s53] ss:$16 sm:%s54]
  %vm56 = vcmask 1047558
  %v57 = vsel %vm56, %v55, %v52
  %58 = vrot.lane.b32.xlu0 %v57, 112
  %v59 = vpop.permute.xlu0 %58
  %vm60 = vcmask 982912
  %61 = vst.msk [vmem:[%s1] sm:$0xff] %vm60, %v59
  %s62 = scalar_lea.vmem %s0, 13
  %s63 = smov 3
  %v64 = vld [vmem:[%s62] ss:$16 sm:%s63]
  %s65 = scalar_lea.vmem %s0, 13
  %s66 = smov 12
  %v67 = vld [vmem:[%s65] ss:$16 sm:%s66]
  %vm68 = vcmask 1043458
  %v69 = vsel %vm68, %v67, %v64
  %s70 = scalar_lea.vmem %s0, 13
  %s71 = smov 48
  %v72 = vld [vmem:[%s70] ss:$16 sm:%s71]
  %vm73 = vcmask 1045508
  %v74 = vsel %vm73, %v72, %v69
  %s75 = scalar_lea.vmem %s0, 13
  %s76 = smov 192
  %v77 = vld [vmem:[%s75] ss:$16 sm:%s76]
  %vm78 = vcmask 1047558
  %v79 = vsel %vm78, %v77, %v74
  %80 = vrot.lane.b32.xlu0 %v79, 104
  %v81 = vpop.permute.xlu0 %80
  %vm82 = vcmask 917312
  %83 = vst.msk [vmem:[%s1] sm:$0xff] %vm82, %v81
  %s84 = scalar_lea.vmem %s0, 12
  %s85 = smov 3
  %v86 = vld [vmem:[%s84] ss:$16 sm:%s85]
  %s87 = scalar_lea.vmem %s0, 12
  %s88 = smov 12
  %v89 = vld [vmem:[%s87] ss:$16 sm:%s88]
  %vm90 = vcmask 1043458
  %v91 = vsel %vm90, %v89, %v86
  %s92 = scalar_lea.vmem %s0, 12
  %s93 = smov 48
  %v94 = vld [vmem:[%s92] ss:$16 sm:%s93]
  %vm95 = vcmask 1045508
  %v96 = vsel %vm95, %v94, %v91
  %s97 = scalar_lea.vmem %s0, 12
  %s98 = smov 192
  %v99 = vld [vmem:[%s97] ss:$16 sm:%s98]
  %vm100 = vcmask 1047558
  %v101 = vsel %vm100, %v99, %v96
  %102 = vrot.lane.b32.xlu0 %v101, 96
  %v103 = vpop.permute.xlu0 %102
  %vm104 = vcmask 851712
  %105 = vst.msk [vmem:[%s1] sm:$0xff] %vm104, %v103
  %s106 = scalar_lea.vmem %s0, 11
  %s107 = smov 3
  %v108 = vld [vmem:[%s106] ss:$16 sm:%s107]
  %s109 = scalar_lea.vmem %s0, 11
  %s110 = smov 12
  %v111 = vld [vmem:[%s109] ss:$16 sm:%s110]
  %vm112 = vcmask 1043458
  %v113 = vsel %vm112, %v111, %v108
  %s114 = scalar_lea.vmem %s0, 11
  %s115 = smov 48
  %v116 = vld [vmem:[%s114] ss:$16 sm:%s115]
  %vm117 = vcmask 1045508
  %v118 = vsel %vm117, %v116, %v113
  %s119 = scalar_lea.vmem %s0, 11
  %s120 = smov 192
  %v121 = vld [vmem:[%s119] ss:$16 sm:%s120]
  %vm122 = vcmask 1047558
  %v123 = vsel %vm122, %v121, %v118
  %124 = vrot.lane.b32.xlu0 %v123, 88
  %v125 = vpop.permute.xlu0 %124
  %vm126 = vcmask 786112
  %127 = vst.msk [vmem:[%s1] sm:$0xff] %vm126, %v125
  %s128 = scalar_lea.vmem %s0, 10
  %s129 = smov 3
  %v130 = vld [vmem:[%s128] ss:$16 sm:%s129]
  %s131 = scalar_lea.vmem %s0, 10
  %s132 = smov 12
  %v133 = vld [vmem:[%s131] ss:$16 sm:%s132]
  %vm134 = vcmask 1043458
  %v135 = vsel %vm134, %v133, %v130
  %s136 = scalar_lea.vmem %s0, 10
  %s137 = smov 48
  %v138 = vld [vmem:[%s136] ss:$16 sm:%s137]
  %vm139 = vcmask 1045508
  %v140 = vsel %vm139, %v138, %v135
  %s141 = scalar_lea.vmem %s0, 10
  %s142 = smov 192
  %v143 = vld [vmem:[%s141] ss:$16 sm:%s142]
  %vm144 = vcmask 1047558
  %v145 = vsel %vm144, %v143, %v140
  %146 = vrot.lane.b32.xlu0 %v145, 80
  %v147 = vpop.permute.xlu0 %146
  %vm148 = vcmask 720512
  %149 = vst.msk [vmem:[%s1] sm:$0xff] %vm148, %v147
  %s150 = scalar_lea.vmem %s0, 9
  %s151 = smov 3
  %v152 = vld [vmem:[%s150] ss:$16 sm:%s151]
  %s153 = scalar_lea.vmem %s0, 9
  %s154 = smov 12
  %v155 = vld [vmem:[%s153] ss:$16 sm:%s154]
  %vm156 = vcmask 1043458
  %v157 = vsel %vm156, %v155, %v152
  %s158 = scalar_lea.vmem %s0, 9
  %s159 = smov 48
  %v160 = vld [vmem:[%s158] ss:$16 sm:%s159]
  %vm161 = vcmask 1045508
  %v162 = vsel %vm161, %v160, %v157
  %s163 = scalar_lea.vmem %s0, 9
  %s164 = smov 192
  %v165 = vld [vmem:[%s163] ss:$16 sm:%s164]
  %vm166 = vcmask 1047558
  %v167 = vsel %vm166, %v165, %v162
  %168 = vrot.lane.b32.xlu0 %v167, 72
  %v169 = vpop.permute.xlu0 %168
  %vm170 = vcmask 654912
  %171 = vst.msk [vmem:[%s1] sm:$0xff] %vm170, %v169
  %s172 = scalar_lea.vmem %s0, 8
  %s173 = smov 3
  %v174 = vld [vmem:[%s172] ss:$16 sm:%s173]
  %s175 = scalar_lea.vmem %s0, 8
  %s176 = smov 12
  %v177 = vld [vmem:[%s175] ss:$16 sm:%s176]
  %vm178 = vcmask 1043458
  %v179 = vsel %vm178, %v177, %v174
  %s180 = scalar_lea.vmem %s0, 8
  %s181 = smov 48
  %v182 = vld [vmem:[%s180] ss:$16 sm:%s181]
  %vm183 = vcmask 1045508
  %v184 = vsel %vm183, %v182, %v179
  %s185 = scalar_lea.vmem %s0, 8
  %s186 = smov 192
  %v187 = vld [vmem:[%s185] ss:$16 sm:%s186]
  %vm188 = vcmask 1047558
  %v189 = vsel %vm188, %v187, %v184
  %190 = vrot.lane.b32.xlu0 %v189, 64
  %v191 = vpop.permute.xlu0 %190
  %vm192 = vcmask 589312
  %193 = vst.msk [vmem:[%s1] sm:$0xff] %vm192, %v191
  %s194 = scalar_lea.vmem %s0, 7
  %s195 = smov 3
  %v196 = vld [vmem:[%s194] ss:$16 sm:%s195]
  %s197 = scalar_lea.vmem %s0, 7
  %s198 = smov 12
  %v199 = vld [vmem:[%s197] ss:$16 sm:%s198]
  %vm200 = vcmask 1043458
  %v201 = vsel %vm200, %v199, %v196
  %s202 = scalar_lea.vmem %s0, 7
  %s203 = smov 48
  %v204 = vld [vmem:[%s202] ss:$16 sm:%s203]
  %vm205 = vcmask 1045508
  %v206 = vsel %vm205, %v204, %v201
  %s207 = scalar_lea.vmem %s0, 7
  %s208 = smov 192
  %v209 = vld [vmem:[%s207] ss:$16 sm:%s208]
  %vm210 = vcmask 1047558
  %v211 = vsel %vm210, %v209, %v206
  %212 = vrot.lane.b32.xlu0 %v211, 56
  %v213 = vpop.permute.xlu0 %212
  %vm214 = vcmask 523712
  %215 = vst.msk [vmem:[%s1] sm:$0xff] %vm214, %v213
  %s216 = scalar_lea.vmem %s0, 6
  %s217 = smov 3
  %v218 = vld [vmem:[%s216] ss:$16 sm:%s217]
  %s219 = scalar_lea.vmem %s0, 6
  %s220 = smov 12
  %v221 = vld [vmem:[%s219] ss:$16 sm:%s220]
  %vm222 = vcmask 1043458
  %v223 = vsel %vm222, %v221, %v218
  %s224 = scalar_lea.vmem %s0, 6
  %s225 = smov 48
  %v226 = vld [vmem:[%s224] ss:$16 sm:%s225]
  %vm227 = vcmask 1045508
  %v228 = vsel %vm227, %v226, %v223
  %s229 = scalar_lea.vmem %s0, 6
  %s230 = smov 192
  %v231 = vld [vmem:[%s229] ss:$16 sm:%s230]
  %vm232 = vcmask 1047558
  %v233 = vsel %vm232, %v231, %v228
  %234 = vrot.lane.b32.xlu0 %v233, 48
  %v235 = vpop.permute.xlu0 %234
  %vm236 = vcmask 458112
  %237 = vst.msk [vmem:[%s1] sm:$0xff] %vm236, %v235
  %s238 = scalar_lea.vmem %s0, 5
  %s239 = smov 3
  %v240 = vld [vmem:[%s238] ss:$16 sm:%s239]
  %s241 = scalar_lea.vmem %s0, 5
  %s242 = smov 12
  %v243 = vld [vmem:[%s241] ss:$16 sm:%s242]
  %vm244 = vcmask 1043458
  %v245 = vsel %vm244, %v243, %v240
  %s246 = scalar_lea.vmem %s0, 5
  %s247 = smov 48
  %v248 = vld [vmem:[%s246] ss:$16 sm:%s247]
  %vm249 = vcmask 1045508
  %v250 = vsel %vm249, %v248, %v245
  %s251 = scalar_lea.vmem %s0, 5
  %s252 = smov 192
  %v253 = vld [vmem:[%s251] ss:$16 sm:%s252]
  %vm254 = vcmask 1047558
  %v255 = vsel %vm254, %v253, %v250
  %256 = vrot.lane.b32.xlu0 %v255, 40
  %v257 = vpop.permute.xlu0 %256
  %vm258 = vcmask 392512
  %259 = vst.msk [vmem:[%s1] sm:$0xff] %vm258, %v257
  %s260 = scalar_lea.vmem %s0, 4
  %s261 = smov 3
  %v262 = vld [vmem:[%s260] ss:$16 sm:%s261]
  %s263 = scalar_lea.vmem %s0, 4
  %s264 = smov 12
  %v265 = vld [vmem:[%s263] ss:$16 sm:%s264]
  %vm266 = vcmask 1043458
  %v267 = vsel %vm266, %v265, %v262
  %s268 = scalar_lea.vmem %s0, 4
  %s269 = smov 48
  %v270 = vld [vmem:[%s268] ss:$16 sm:%s269]
  %vm271 = vcmask 1045508
  %v272 = vsel %vm271, %v270, %v267
  %s273 = scalar_lea.vmem %s0, 4
  %s274 = smov 192
  %v275 = vld [vmem:[%s273] ss:$16 sm:%s274]
  %vm276 = vcmask 1047558
  %v277 = vsel %vm276, %v275, %v272
  %278 = vrot.lane.b32.xlu0 %v277, 32
  %v279 = vpop.permute.xlu0 %278
  %vm280 = vcmask 326912
  %281 = vst.msk [vmem:[%s1] sm:$0xff] %vm280, %v279
  %s282 = scalar_lea.vmem %s0, 3
  %s283 = smov 3
  %v284 = vld [vmem:[%s282] ss:$16 sm:%s283]
  %s285 = scalar_lea.vmem %s0, 3
  %s286 = smov 12
  %v287 = vld [vmem:[%s285] ss:$16 sm:%s286]
  %vm288 = vcmask 1043458
  %v289 = vsel %vm288, %v287, %v284
  %s290 = scalar_lea.vmem %s0, 3
  %s291 = smov 48
  %v292 = vld [vmem:[%s290] ss:$16 sm:%s291]
  %vm293 = vcmask 1045508
  %v294 = vsel %vm293, %v292, %v289
  %s295 = scalar_lea.vmem %s0, 3
  %s296 = smov 192
  %v297 = vld [vmem:[%s295] ss:$16 sm:%s296]
  %vm298 = vcmask 1047558
  %v299 = vsel %vm298, %v297, %v294
  %300 = vrot.lane.b32.xlu0 %v299, 24
  %v301 = vpop.permute.xlu0 %300
  %vm302 = vcmask 261312
  %303 = vst.msk [vmem:[%s1] sm:$0xff] %vm302, %v301
  %s304 = scalar_lea.vmem %s0, 2
  %s305 = smov 3
  %v306 = vld [vmem:[%s304] ss:$16 sm:%s305]
  %s307 = scalar_lea.vmem %s0, 2
  %s308 = smov 12
  %v309 = vld [vmem:[%s307] ss:$16 sm:%s308]
  %vm310 = vcmask 1043458
  %v311 = vsel %vm310, %v309, %v306
  %s312 = scalar_lea.vmem %s0, 2
  %s313 = smov 48
  %v314 = vld [vmem:[%s312] ss:$16 sm:%s313]
  %vm315 = vcmask 1045508
  %v316 = vsel %vm315, %v314, %v311
  %s317 = scalar_lea.vmem %s0, 2
  %s318 = smov 192
  %v319 = vld [vmem:[%s317] ss:$16 sm:%s318]
  %vm320 = vcmask 1047558
  %v321 = vsel %vm320, %v319, %v316
  %322 = vrot.lane.b32.xlu0 %v321, 16
  %v323 = vpop.permute.xlu0 %322
  %vm324 = vcmask 195712
  %325 = vst.msk [vmem:[%s1] sm:$0xff] %vm324, %v323
  %s326 = scalar_lea.vmem %s0, 1
  %s327 = smov 3
  %v328 = vld [vmem:[%s326] ss:$16 sm:%s327]
  %s329 = scalar_lea.vmem %s0, 1
  %s330 = smov 12
  %v331 = vld [vmem:[%s329] ss:$16 sm:%s330]
  %vm332 = vcmask 1043458
  %v333 = vsel %vm332, %v331, %v328
  %s334 = scalar_lea.vmem %s0, 1
  %s335 = smov 48
  %v336 = vld [vmem:[%s334] ss:$16 sm:%s335]
  %vm337 = vcmask 1045508
  %v338 = vsel %vm337, %v336, %v333
  %s339 = scalar_lea.vmem %s0, 1
  %s340 = smov 192
  %v341 = vld [vmem:[%s339] ss:$16 sm:%s340]
  %vm342 = vcmask 1047558
  %v343 = vsel %vm342, %v341, %v338
  %344 = vrot.lane.b32.xlu0 %v343, 8
  %v345 = vpop.permute.xlu0 %344
  %vm346 = vcmask 130112
  %347 = vst.msk [vmem:[%s1] sm:$0xff] %vm346, %v345

// kernel: tile.33
$region0: #{tile.33}
  #allocation0 [shape = 's32[1]{0}', space=sflag, size = 0x4, scoped, tag = 'scoped memory for tile.33']
  %s0 = inlined_call_operand.vmem [shape: f32[8], index: 0, kind: input, shape index: {}]
  %s1 = inlined_call_operand.vmem [shape: f32[16,8], index: 1, kind: output, shape index: {}]
  // Predicated region
  $region2: #{tile.33} parent=0 // pred_check
    _
  $region3: #{tile.33} parent=0 // pred_check_branch
    %3 = sbr.rel (0) target = $region5
  $region4: #{tile.33} parent=0 // pred_region
    _
  $region5: #{tile.33} parent=0 // pred_fallthru
    _
  %v4 = vld [vmem:[%s0] ss:$0 sm:$0xff]
  %5 = vst [vmem:[%s1] sm:$0xff] %v4
  %s6 = scalar_lea.vmem %s1, 8
  %7 = vst [vmem:[%s6] sm:$0xff] %v4

// kernel: tile.34
$region0: #{tile.34}
  %s0 = inlined_call_operand.vmem [shape: f32[16,8], index: 0, kind: input, shape index: {}]
  %s1 = inlined_call_operand.vmem [shape: f32[1,128], index: 1, kind: output, shape index: {}]
  $region1: #{tile.34} parent=0
    #allocation0 [shape = 'u8[4096]{0}', space=vmem, size = 0x1000, scoped, tag = 'scoped mem for output reshape']
    %v2 = vld [vmem:[%s0] sm:$0x1]
    %vm3 = vcmask 64512
    %4 = vst.msk [vmem:[#allocation0] sm:$0x1] %vm3, %v2
    %s5 = scalar_lea.vmem %s0, 15
    %v6 = vld [vmem:[%s5] sm:$0x1]
    %7 = vrot.lane.b32.xlu0 %v6, 120
    %v8 = vpop.permute.xlu0 %7
    %vm9 = vcmask 1048512
    %10 = vst.msk [vmem:[#allocation0] sm:$0x1] %vm9, %v8
    %s11 = scalar_lea.vmem %s0, 14
    %v12 = vld [vmem:[%s11] sm:$0x1]
    %13 = vrot.lane.b32.xlu0 %v12, 112
    %v14 = vpop.permute.xlu0 %13
    %vm15 = vcmask 982912
    %16 = vst.msk [vmem:[#allocation0] sm:$0x1] %vm15, %v14
    %s17 = scalar_lea.vmem %s0, 13
    %v18 = vld [vmem:[%s17] sm:$0x1]
    %19 = vrot.lane.b32.xlu0 %v18, 104
    %v20 = vpop.permute.xlu0 %19
    %vm21 = vcmask 917312
    %22 = vst.msk [vmem:[#allocation0] sm:$0x1] %vm21, %v20
    %s23 = scalar_lea.vmem %s0, 12
    %v24 = vld [vmem:[%s23] sm:$0x1]
    %25 = vrot.lane.b32.xlu0 %v24, 96
    %v26 = vpop.permute.xlu0 %25
    %vm27 = vcmask 851712
    %28 = vst.msk [vmem:[#allocation0] sm:$0x1] %vm27, %v26
    %s29 = scalar_lea.vmem %s0, 11
    %v30 = vld [vmem:[%s29] sm:$0x1]
    %31 = vrot.lane.b32.xlu0 %v30, 88
    %v32 = vpop.permute.xlu0 %31
    %vm33 = vcmask 786112
    %34 = vst.msk [vmem:[#allocation0] sm:$0x1] %vm33, %v32
    %s35 = scalar_lea.vmem %s0, 10
    %v36 = vld [vmem:[%s35] sm:$0x1]
    %37 = vrot.lane.b32.xlu0 %v36, 80
    %v38 = vpop.permute.xlu0 %37
    %vm39 = vcmask 720512
    %40 = vst.msk [vmem:[#allocation0] sm:$0x1] %vm39, %v38
    %s41 = scalar_lea.vmem %s0, 9
    %v42 = vld [vmem:[%s41] sm:$0x1]
    %43 = vrot.lane.b32.xlu0 %v42, 72
    %v44 = vpop.permute.xlu0 %43
    %vm45 = vcmask 654912
    %46 = vst.msk [vmem:[#allocation0] sm:$0x1] %vm45, %v44
    %s47 = scalar_lea.vmem %s0, 8
    %v48 = vld [vmem:[%s47] sm:$0x1]
    %49 = vrot.lane.b32.xlu0 %v48, 64
    %v50 = vpop.permute.xlu0 %49
    %vm51 = vcmask 589312
    %52 = vst.msk [vmem:[#allocation0] sm:$0x1] %vm51, %v50
    %s53 = scalar_lea.vmem %s0, 7
    %v54 = vld [vmem:[%s53] sm:$0x1]
    %55 = vrot.lane.b32.xlu0 %v54, 56
    %v56 = vpop.permute.xlu0 %55
    %vm57 = vcmask 523712
    %58 = vst.msk [vmem:[#allocation0] sm:$0x1] %vm57, %v56
    %s59 = scalar_lea.vmem %s0, 6
    %v60 = vld [vmem:[%s59] sm:$0x1]
    %61 = vrot.lane.b32.xlu0 %v60, 48
    %v62 = vpop.permute.xlu0 %61
    %vm63 = vcmask 458112
    %64 = vst.msk [vmem:[#allocation0] sm:$0x1] %vm63, %v62
    %s65 = scalar_lea.vmem %s0, 5
    %v66 = vld [vmem:[%s65] sm:$0x1]
    %67 = vrot.lane.b32.xlu0 %v66, 40
    %v68 = vpop.permute.xlu0 %67
    %vm69 = vcmask 392512
    %70 = vst.msk [vmem:[#allocation0] sm:$0x1] %vm69, %v68
    %s71 = scalar_lea.vmem %s0, 4
    %v72 = vld [vmem:[%s71] sm:$0x1]
    %73 = vrot.lane.b32.xlu0 %v72, 32
    %v74 = vpop.permute.xlu0 %73
    %vm75 = vcmask 326912
    %76 = vst.msk [vmem:[#allocation0] sm:$0x1] %vm75, %v74
    %s77 = scalar_lea.vmem %s0, 3
    %v78 = vld [vmem:[%s77] sm:$0x1]
    %79 = vrot.lane.b32.xlu0 %v78, 24
    %v80 = vpop.permute.xlu0 %79
    %vm81 = vcmask 261312
    %82 = vst.msk [vmem:[#allocation0] sm:$0x1] %vm81, %v80
    %s83 = scalar_lea.vmem %s0, 2
    %v84 = vld [vmem:[%s83] sm:$0x1]
    %85 = vrot.lane.b32.xlu0 %v84, 16
    %v86 = vpop.permute.xlu0 %85
    %vm87 = vcmask 195712
    %88 = vst.msk [vmem:[#allocation0] sm:$0x1] %vm87, %v86
    %s89 = scalar_lea.vmem %s0, 1
    %v90 = vld [vmem:[%s89] sm:$0x1]
    %91 = vrot.lane.b32.xlu0 %v90, 8
    %v92 = vpop.permute.xlu0 %91
    %vm93 = vcmask 130112
    %94 = vst.msk [vmem:[#allocation0] sm:$0x1] %vm93, %v92
    %s96 = sshll.u32 1, 1
    %s97 = ssub.s32 %s96, 1
    %v99 = vld [vmem:[#allocation0] sm:%s97]
    %s100 = sshll.u32 1, 1
    %s101 = ssub.s32 %s100, 1
    %102 = vst [vmem:[%s1] sm:%s101] %v99

// kernel: double_conv.1
$region0: #{double_conv.1}
  #allocation0 [shape = 'u32[]', space=smem, size = 0x4, offset = 0x4, fixed_abs, tag = 'smem constant byte address 0x4 - core index']
  #allocation1 [shape = 'u32[144,128]{1,0:T(1,128)}', space=vmem, size = 0x12000, scoped, tag = 'internal scratch']
  #allocation2 [shape = 'bf16[2,18,128]{2,1,0:T(8,128)(2,1)}', space=vmem, size = 0x3000, scoped, tag = 'scratch operand']
  #allocation3 [shape = 'bf16[2,18,128]{2,1,0:T(8,128)(2,1)}', space=vmem, size = 0x3000, scoped, tag = 'scratch operand']
  %s0 = inlined_call_operand.vmem [shape: bf16[2,16,128], index: 0, kind: input, shape index: {}]
  %s1 = inlined_call_operand.vmem [shape: bf16[384,128], index: 1, kind: input, shape index: {}]
  %s2 = inlined_call_operand.vmem [shape: f32[1,128], index: 2, kind: input, shape index: {}]
  %s3 = inlined_call_operand.vmem [shape: f32[1,8], index: 3, kind: input, shape index: {}]
  %s4 = inlined_call_operand.vmem [shape: f32[1,8], index: 4, kind: input, shape index: {}]
  %s5 = inlined_call_operand.vmem [shape: f32[128,8], index: 5, kind: input, shape index: {}, may-alias: {5,11}]
  %s6 = inlined_call_operand.vmem [shape: f32[8,128], index: 6, kind: input, shape index: {}, may-alias: {6,12}]
  %s7 = inlined_call_operand.vmem [shape: bf16[384,128], index: 7, kind: input, shape index: {}]
  %s8 = inlined_call_operand.vmem [shape: f32[1,128], index: 8, kind: input, shape index: {}]
  %s9 = inlined_call_operand.vmem [shape: f32[1,8], index: 9, kind: input, shape index: {}]
  %s10 = inlined_call_operand.vmem [shape: f32[1,8], index: 10, kind: input, shape index: {}]
  %s11 = inlined_call_operand.vmem [shape: f32[128,8], index: 11, kind: input, shape index: {}, may-alias: {5,11}]
  %s12 = inlined_call_operand.vmem [shape: f32[8,128], index: 12, kind: input, shape index: {}, may-alias: {6,12}]
  %s13 = inlined_call_operand.vmem [shape: f32[32,128], index: 13, kind: output, shape index: {}]
  %s14 = sld [smem:[#allocation0]]
  $region62: #{double_conv.1} parent=0
    _
  %s16 = ssub.s32 1, %s14
  %s17 = scalar_select 0, %s16, %s14
  // Predicated region
  $region2: #{double_conv.1} parent=0 // pred_check
    _
  $region3: #{double_conv.1} parent=0 // pred_check_branch
    %19 = sbr.rel (0) target = $region5
  $region4: #{double_conv.1} parent=0 // pred_region
    _
  $region5: #{double_conv.1} parent=0 // pred_fallthru
    _
  // Predicated region
  $region6: #{double_conv.1} parent=0 // pred_check
    _
  $region7: #{double_conv.1} parent=0 // pred_check_branch
    %21 = sbr.rel (0) target = $region9
  $region8: #{double_conv.1} parent=0 // pred_region
    _
  $region9: #{double_conv.1} parent=0 // pred_fallthru
    _
  // Predicated region
  $region10: #{double_conv.1} parent=0 // pred_check
    _
  $region11: #{double_conv.1} parent=0 // pred_check_branch
    %23 = sbr.rel (0) target = $region13
  $region12: #{double_conv.1} parent=0 // pred_region
    _
  $region13: #{double_conv.1} parent=0 // pred_fallthru
    _
  // Predicated region
  $region14: #{double_conv.1} parent=0 // pred_check
    _
  $region15: #{double_conv.1} parent=0 // pred_check_branch
    %25 = sbr.rel (0) target = $region17
  $region16: #{double_conv.1} parent=0 // pred_region
    _
  $region17: #{double_conv.1} parent=0 // pred_fallthru
    _
  // Predicated region
  $region18: #{double_conv.1} parent=0 // pred_check
    _
  $region19: #{double_conv.1} parent=0 // pred_check_branch
    %27 = sbr.rel (0) target = $region21
  $region20: #{double_conv.1} parent=0 // pred_region
    _
  $region21: #{double_conv.1} parent=0 // pred_fallthru
    _
  // Predicated region
  $region22: #{double_conv.1} parent=0 // pred_check
    _
  $region23: #{double_conv.1} parent=0 // pred_check_branch
    %29 = sbr.rel (0) target = $region25
  $region24: #{double_conv.1} parent=0 // pred_region
    _
  $region25: #{double_conv.1} parent=0 // pred_fallthru
    _
  // Predicated region
  $region26: #{double_conv.1} parent=0 // pred_check
    _
  $region27: #{double_conv.1} parent=0 // pred_check_branch
    %31 = sbr.rel (0) target = $region29
  $region28: #{double_conv.1} parent=0 // pred_region
    _
  $region29: #{double_conv.1} parent=0 // pred_fallthru
    _
  // Predicated region
  $region30: #{double_conv.1} parent=0 // pred_check
    _
  $region31: #{double_conv.1} parent=0 // pred_check_branch
    %33 = sbr.rel (0) target = $region33
  $region32: #{double_conv.1} parent=0 // pred_region
    _
  $region33: #{double_conv.1} parent=0 // pred_fallthru
    _
  // Predicated region
  $region34: #{double_conv.1} parent=0 // pred_check
    _
  $region35: #{double_conv.1} parent=0 // pred_check_branch
    %35 = sbr.rel (0) target = $region37
  $region36: #{double_conv.1} parent=0 // pred_region
    _
  $region37: #{double_conv.1} parent=0 // pred_fallthru
    _
  // Predicated region
  $region38: #{double_conv.1} parent=0 // pred_check
    _
  $region39: #{double_conv.1} parent=0 // pred_check_branch
    %37 = sbr.rel (0) target = $region41
  $region40: #{double_conv.1} parent=0 // pred_region
    _
  $region41: #{double_conv.1} parent=0 // pred_fallthru
    _
  // Predicated region
  $region42: #{double_conv.1} parent=0 // pred_check
    _
  $region43: #{double_conv.1} parent=0 // pred_check_branch
    %39 = sbr.rel (0) target = $region45
  $region44: #{double_conv.1} parent=0 // pred_region
    _
  $region45: #{double_conv.1} parent=0 // pred_fallthru
    _
  // Predicated region
  $region46: #{double_conv.1} parent=0 // pred_check
    _
  $region47: #{double_conv.1} parent=0 // pred_check_branch
    %41 = sbr.rel (0) target = $region49
  $region48: #{double_conv.1} parent=0 // pred_region
    _
  $region49: #{double_conv.1} parent=0 // pred_fallthru
    _
  // Predicated region
  $region50: #{double_conv.1} parent=0 // pred_check
    _
  $region51: #{double_conv.1} parent=0 // pred_check_branch
    %43 = sbr.rel (0) target = $region53
  $region52: #{double_conv.1} parent=0 // pred_region
    _
  $region53: #{double_conv.1} parent=0 // pred_fallthru
    _
  %vm45 = vcmask 1040384
  %vm46 = vsmask.f32 256
  %vm47 = vmand %vm45, %vm46
  %v48 = vld [vmem:[#allocation2] sm:$0x1]
  %v49 = vsel %vm47, 0, %v48
  %50 = vst [vmem:[#allocation2] sm:$0x1] %v49
  %v51 = vld [vmem:[#allocation2 + $0xc] sm:$0x1]
  %v52 = vsel %vm47, 0, %v51
  %53 = vst [vmem:[#allocation2 + $0xc] sm:$0x1] %v52
  %vm54 = vsmask.f32 7938
  %vm55 = vmand %vm45, %vm54
  %v56 = vld [vmem:[#allocation2 + $0x8] sm:$0x1]
  %v57 = vsel %vm55, 0, %v56
  %58 = vst [vmem:[#allocation2 + $0x8] sm:$0x1] %v57
  %v59 = vld [vmem:[#allocation2 + $0x14] sm:$0x1]
  %v60 = vsel %vm55, 0, %v59
  %61 = vst [vmem:[#allocation2 + $0x14] sm:$0x1] %v60
  %v62 = vld [vmem:[%s0] sm:$0xf]
  %v63 = vld [vmem:[%s0 + $0x4] sm:$0xf]
  %v64 = vld [vmem:[%s0 + $0x8] sm:$0xf]
  %v65 = vld [vmem:[%s0 + $0xc] sm:$0xf]
  %vm66 = vsmask.f32 4368
  %vm67 = vmor %vm46, %vm66
  %v69 = vshrl.u32 %v62, 16
  %v71 = vrot.slane %v69, 7
  %v72 = vshll.u32 %v62, 16
  %v74 = vor.u32 %v71, %v72
  %v75 = vrot.slane %v71, 4
  %v77 = vshrl.u32 %v63, 16
  %v79 = vrot.slane %v77, 7
  %v80 = vshll.u32 %v63, 16
  %v82 = vor.u32 %v79, %v80
  %v83 = vsel %vm67, %v75, %v82
  %v84 = vrot.slane %v79, 4
  %v86 = vshrl.u32 %v64, 16
  %v88 = vrot.slane %v86, 7
  %v89 = vshll.u32 %v64, 16
  %v91 = vor.u32 %v88, %v89
  %v92 = vrot.slane %v88, 4
  %v94 = vshrl.u32 %v65, 16
  %v96 = vrot.slane %v94, 7
  %v97 = vshll.u32 %v65, 16
  %v99 = vor.u32 %v96, %v97
  %v100 = vsel %vm67, %v92, %v99
  %v101 = vrot.slane %v96, 4
  %vm108 = vcmask 1043456
  %vm109 = vmand %vm108, %vm54
  %v110 = vld [vmem:[#allocation2] sm:$0xf]
  %v111 = vsel %vm109, %v74, %v110
  %112 = vst [vmem:[#allocation2] sm:$0xf] %v111
  %113 = vst [vmem:[#allocation2 + $0x4] sm:$0xf] %v83
  %v114 = vld [vmem:[#allocation2 + $0x8] sm:$0x1]
  %v115 = vsel %vm47, %v84, %v114
  %116 = vst [vmem:[#allocation2 + $0x8] sm:$0x1] %v115
  %v117 = vld [vmem:[#allocation2 + $0xc] sm:$0xf]
  %v118 = vsel %vm109, %v91, %v117
  %119 = vst [vmem:[#allocation2 + $0xc] sm:$0xf] %v118
  %120 = vst [vmem:[#allocation2 + $0x10] sm:$0xf] %v100
  %v121 = vld [vmem:[#allocation2 + $0x14] sm:$0x1]
  %v122 = vsel %vm47, %v101, %v121
  %123 = vst [vmem:[#allocation2 + $0x14] sm:$0x1] %v122
  %v124 = vld [vmem:[#allocation2] sm:$0xf]
  %v125 = vld [vmem:[#allocation2 + $0x4] sm:$0xf]
  %v126 = vld [vmem:[#allocation2 + $0xc] sm:$0xf]
  %v127 = vld [vmem:[#allocation2 + $0x10] sm:$0xf]
  %v128 = vld [vmem:[#allocation2 + $0x8] sm:$0x1]
  %v129 = vld [vmem:[#allocation2 + $0x14] sm:$0x1]
  %vm130 = vsmask.f32 3328
  %vm131 = vsmask.f32 7440
  %vm132 = vmor %vm130, %vm131
  %v134 = vshrl.u32 %v124, 16
  %v136 = vrot.slane %v134, 4
  %v137 = vshll.u32 %v124, 16
  %v139 = vrot.slane %v137, 5
  %v140 = vor.u32 %v136, %v139
  %v141 = vrot.slane %v140, 4
  %v143 = vshll.u32 %v125, 16
  %v145 = vrot.slane %v143, 5
  %v146 = vsel %vm132, %v141, %v145
  %v147 = vshrl.u32 %v125, 16
  %v149 = vrot.slane %v147, 4
  %v150 = vor.u32 %v149, %v145
  %v151 = vrot.slane %v150, 4
  %v153 = vshll.u32 %v128, 16
  %v155 = vrot.slane %v153, 5
  %v156 = vsel %vm132, %v151, %v155
  %v158 = vshrl.u32 %v126, 16
  %v160 = vrot.slane %v158, 4
  %v161 = vshll.u32 %v126, 16
  %v163 = vrot.slane %v161, 5
  %v164 = vor.u32 %v160, %v163
  %v165 = vrot.slane %v164, 4
  %v167 = vshll.u32 %v127, 16
  %v169 = vrot.slane %v167, 5
  %v170 = vsel %vm132, %v165, %v169
  %v171 = vshrl.u32 %v127, 16
  %v173 = vrot.slane %v171, 4
  %v174 = vor.u32 %v173, %v169
  %v175 = vrot.slane %v174, 4
  %v177 = vshll.u32 %v129, 16
  %v179 = vrot.slane %v177, 5
  %v180 = vsel %vm132, %v175, %v179
  %v181 = vld [vmem:[#allocation2] sm:$0xe]
  %v182 = vld [vmem:[#allocation2 + $0xc] sm:$0xe]
  %vm189 = vcmask 1042432
  %vm190 = vcmask 1046532
  %vm191 = vmor %vm189, %vm190
  %v192 = vrot.slane %v181, 5
  %v193 = vrot.slane %v192, 4
  %v194 = vrot.slane %v125, 5
  %v195 = vsel %vm191, %v193, %v194
  %v196 = vrot.slane %v194, 4
  %v197 = vrot.slane %v128, 5
  %v198 = vsel %vm191, %v196, %v197
  %v199 = vrot.slane %v182, 5
  %v200 = vrot.slane %v199, 4
  %v201 = vrot.slane %v127, 5
  %v202 = vsel %vm191, %v200, %v201
  %v203 = vrot.slane %v201, 4
  %v204 = vrot.slane %v129, 5
  %v205 = vsel %vm191, %v203, %v204
  %v208 = vunpack.c.l.b16 %v124
  %v209 = vunpack.c.l.b16 %v125
  %v210 = vunpack.c.l.b16 %v126
  %v211 = vunpack.c.l.b16 %v127
  %v212 = vpack.c.b16 %v209, %v208
  %v213 = vpack.c.b16 %v211, %v210
  %v216 = vunpack.c.l.b16 %v146
  %v217 = vunpack.c.l.b16 %v156
  %v218 = vunpack.c.l.b16 %v170
  %v219 = vunpack.c.l.b16 %v180
  %v220 = vpack.c.b16 %v217, %v216
  %v221 = vpack.c.b16 %v219, %v218
  %v224 = vunpack.c.l.b16 %v195
  %v225 = vunpack.c.l.b16 %v198
  %v226 = vunpack.c.l.b16 %v202
  %v227 = vunpack.c.l.b16 %v205
  %v228 = vpack.c.b16 %v225, %v224
  %v229 = vpack.c.b16 %v227, %v226
  %v232 = vld [vmem:[%s2] sm:$0x1]
  %v233 = vld [vmem:[%s1] sm:$0xf]
  %v234 = vld [vmem:[%s1 + $0x4] sm:$0xf]
  %v235 = vld [vmem:[%s1 + $0x8] sm:$0xf]
  %v236 = vld [vmem:[%s1 + $0xc] sm:$0xf]
  %v237 = vld [vmem:[%s1 + $0x10] sm:$0xf]
  %v238 = vld [vmem:[%s1 + $0x14] sm:$0xf]
  %v239 = vld [vmem:[%s1 + $0x18] sm:$0xf]
  %v240 = vld [vmem:[%s1 + $0x1c] sm:$0xf]
  %v241 = vld [vmem:[%s1 + $0x20] sm:$0xf]
  %v242 = vld [vmem:[%s1 + $0x24] sm:$0xf]
  %v243 = vld [vmem:[%s1 + $0x28] sm:$0xf]
  %v244 = vld [vmem:[%s1 + $0x2c] sm:$0xf]
  %v245 = vld [vmem:[%s1 + $0x30] sm:$0xf]
  %v246 = vld [vmem:[%s1 + $0x34] sm:$0xf]
  %v247 = vld [vmem:[%s1 + $0x38] sm:$0xf]
  %v248 = vld [vmem:[%s1 + $0x3c] sm:$0xf]
  %v249 = vld [vmem:[%s1 + $0x40] sm:$0xf]
  %v250 = vld [vmem:[%s1 + $0x44] sm:$0xf]
  %v251 = vld [vmem:[%s1 + $0x48] sm:$0xf]
  %v252 = vld [vmem:[%s1 + $0x4c] sm:$0xf]
  %v253 = vld [vmem:[%s1 + $0x50] sm:$0xf]
  %v254 = vld [vmem:[%s1 + $0x54] sm:$0xf]
  %v255 = vld [vmem:[%s1 + $0x58] sm:$0xf]
  %v256 = vld [vmem:[%s1 + $0x5c] sm:$0xf]
  %v257 = vld [vmem:[%s1 + $0x60] sm:$0xf]
  %v258 = vld [vmem:[%s1 + $0x64] sm:$0xf]
  %v259 = vld [vmem:[%s1 + $0x68] sm:$0xf]
  %v260 = vld [vmem:[%s1 + $0x6c] sm:$0xf]
  %v261 = vld [vmem:[%s1 + $0x70] sm:$0xf]
  %v262 = vld [vmem:[%s1 + $0x74] sm:$0xf]
  %v263 = vld [vmem:[%s1 + $0x78] sm:$0xf]
  %v264 = vld [vmem:[%s1 + $0x7c] sm:$0xf]
  %v265 = vld [vmem:[%s1 + $0x80] sm:$0xf]
  %v266 = vld [vmem:[%s1 + $0x84] sm:$0xf]
  %v267 = vld [vmem:[%s1 + $0x88] sm:$0xf]
  %v268 = vld [vmem:[%s1 + $0x8c] sm:$0xf]
  %v269 = vld [vmem:[%s1 + $0x90] sm:$0xf]
  %v270 = vld [vmem:[%s1 + $0x94] sm:$0xf]
  %v271 = vld [vmem:[%s1 + $0x98] sm:$0xf]
  %v272 = vld [vmem:[%s1 + $0x9c] sm:$0xf]
  %v273 = vld [vmem:[%s1 + $0xa0] sm:$0xf]
  %v274 = vld [vmem:[%s1 + $0xa4] sm:$0xf]
  %v275 = vld [vmem:[%s1 + $0xa8] sm:$0xf]
  %v276 = vld [vmem:[%s1 + $0xac] sm:$0xf]
  %v277 = vld [vmem:[%s1 + $0xb0] sm:$0xf]
  %v278 = vld [vmem:[%s1 + $0xb4] sm:$0xf]
  %v279 = vld [vmem:[%s1 + $0xb8] sm:$0xf]
  %v280 = vld [vmem:[%s1 + $0xbc] sm:$0xf]
  %v329 = vunpack.c.l.b16 %v233
  %v330 = vunpack.c.l.b16 %v234
  %v331 = vunpack.c.l.b16 %v235
  %v332 = vunpack.c.l.b16 %v236
  %v333 = vunpack.c.l.b16 %v237
  %v334 = vunpack.c.l.b16 %v238
  %v335 = vunpack.c.l.b16 %v239
  %v336 = vunpack.c.l.b16 %v240
  %v337 = vunpack.c.l.b16 %v241
  %v338 = vunpack.c.l.b16 %v242
  %v339 = vunpack.c.l.b16 %v243
  %v340 = vunpack.c.l.b16 %v244
  %v341 = vunpack.c.l.b16 %v245
  %v342 = vunpack.c.l.b16 %v246
  %v343 = vunpack.c.l.b16 %v247
  %v344 = vunpack.c.l.b16 %v248
  %v345 = vunpack.c.l.b16 %v249
  %v346 = vunpack.c.l.b16 %v250
  %v347 = vunpack.c.l.b16 %v251
  %v348 = vunpack.c.l.b16 %v252
  %v349 = vunpack.c.l.b16 %v253
  %v350 = vunpack.c.l.b16 %v254
  %v351 = vunpack.c.l.b16 %v255
  %v352 = vunpack.c.l.b16 %v256
  %v353 = vunpack.c.l.b16 %v257
  %v354 = vunpack.c.l.b16 %v258
  %v355 = vunpack.c.l.b16 %v259
  %v356 = vunpack.c.l.b16 %v260
  %v357 = vunpack.c.l.b16 %v261
  %v358 = vunpack.c.l.b16 %v262
  %v359 = vunpack.c.l.b16 %v263
  %v360 = vunpack.c.l.b16 %v264
  %v361 = vunpack.c.l.b16 %v265
  %v362 = vunpack.c.l.b16 %v266
  %v363 = vunpack.c.l.b16 %v267
  %v364 = vunpack.c.l.b16 %v268
  %v365 = vunpack.c.l.b16 %v269
  %v366 = vunpack.c.l.b16 %v270
  %v367 = vunpack.c.l.b16 %v271
  %v368 = vunpack.c.l.b16 %v272
  %v369 = vunpack.c.l.b16 %v273
  %v370 = vunpack.c.l.b16 %v274
  %v371 = vunpack.c.l.b16 %v275
  %v372 = vunpack.c.l.b16 %v276
  %v373 = vunpack.c.l.b16 %v277
  %v374 = vunpack.c.l.b16 %v278
  %v375 = vunpack.c.l.b16 %v279
  %v376 = vunpack.c.l.b16 %v280
  %v377 = vpack.c.b16 %v330, %v329
  %v378 = vpack.c.b16 %v332, %v331
  %v379 = vpack.c.b16 %v334, %v333
  %v380 = vpack.c.b16 %v336, %v335
  %v381 = vpack.c.b16 %v338, %v337
  %v382 = vpack.c.b16 %v340, %v339
  %v383 = vpack.c.b16 %v342, %v341
  %v384 = vpack.c.b16 %v344, %v343
  %v385 = vpack.c.b16 %v346, %v345
  %v386 = vpack.c.b16 %v348, %v347
  %v387 = vpack.c.b16 %v350, %v349
  %v388 = vpack.c.b16 %v352, %v351
  %v389 = vpack.c.b16 %v354, %v353
  %v390 = vpack.c.b16 %v356, %v355
  %v391 = vpack.c.b16 %v358, %v357
  %v392 = vpack.c.b16 %v360, %v359
  %v393 = vpack.c.b16 %v362, %v361
  %v394 = vpack.c.b16 %v364, %v363
  %v395 = vpack.c.b16 %v366, %v365
  %v396 = vpack.c.b16 %v368, %v367
  %v397 = vpack.c.b16 %v370, %v369
  %v398 = vpack.c.b16 %v372, %v371
  %v399 = vpack.c.b16 %v374, %v373
  %v400 = vpack.c.b16 %v376, %v375
  %425 = vmatprep.subr.bf16.mxu0 0
  %426 = vmatpush1.bf16.msra.mxu0 %v384
  %427 = vmatprep.subr.bf16.mxu0 0
  %428 = vmatpush1.bf16.msra.mxu0 %v383
  %429 = vmatprep.subr.bf16.mxu0 0
  %430 = vmatpush1.bf16.msra.mxu0 %v382
  %431 = vmatprep.subr.bf16.mxu0 0
  %432 = vmatpush1.bf16.msra.mxu0 %v381
  %433 = vmatprep.subr.bf16.mxu0 0
  %434 = vmatpush1.bf16.msra.mxu0 %v380
  %435 = vmatprep.subr.bf16.mxu0 0
  %436 = vmatpush1.bf16.msra.mxu0 %v379
  %437 = vmatprep.subr.bf16.mxu0 0
  %438 = vmatpush1.bf16.msra.mxu0 %v378
  %439 = vmatprep.subr.bf16.mxu0 0
  %440 = vmatpush1.bf16.msra.mxu0 %v377
  %441 = vmatprep.subr.bf16.mxu0 0
  %442 = vmatpush2.bf16.msra.mxu0 %v392
  %443 = vmatprep.subr.bf16.mxu0 0
  %444 = vmatpush2.bf16.msra.mxu0 %v391
  %445 = vmatprep.subr.bf16.mxu0 0
  %446 = vmatpush2.bf16.msra.mxu0 %v390
  %447 = vmatprep.subr.bf16.mxu0 0
  %448 = vmatpush2.bf16.msra.mxu0 %v389
  %449 = vmatprep.subr.bf16.mxu0 0
  %450 = vmatpush2.bf16.msra.mxu0 %v388
  %451 = vmatprep.subr.bf16.mxu0 0
  %452 = vmatpush2.bf16.msra.mxu0 %v387
  %453 = vmatprep.subr.bf16.mxu0 0
  %454 = vmatpush2.bf16.msra.mxu0 %v386
  %455 = vmatprep.subr.bf16.mxu0 0
  %456 = vmatpush2.bf16.msra.mxu0 %v385
  %457 = vmatprep.mubr.bf16.mxu0 %v220
  %458 = vmatmul.mubr.bf16.gmra.mxu0 %v212
  %v459 = vpop.f32.mrf.mxu0
  %v460 = vadd.f32 0.0, %v459
  %v461 = vpop.f32.mrf.mxu0
  %v462 = vpop.f32.mrf.mxu0
  %v463 = vadd.f32 0.0, %v462
  %v464 = vpop.f32.mrf.mxu0
  %465 = vmatprep.mubr.bf16.mxu0 %v221
  %466 = vmatmul.mubr.bf16.gmra.mxu0 %v213
  %v467 = vpop.f32.mrf.mxu0
  %v468 = vadd.f32 0.0, %v467
  %v469 = vpop.f32.mrf.mxu0
  %v470 = vpop.f32.mrf.mxu0
  %v471 = vadd.f32 0.0, %v470
  %v472 = vpop.f32.mrf.mxu0
  %473 = vdwg.mxu0
  %474 = vmatprep.subr.bf16.mxu0 0
  %475 = vmatpush1.bf16.msra.mxu0 %v400
  %476 = vmatprep.subr.bf16.mxu0 0
  %477 = vmatpush1.bf16.msra.mxu0 %v399
  %478 = vmatprep.subr.bf16.mxu0 0
  %479 = vmatpush1.bf16.msra.mxu0 %v398
  %480 = vmatprep.subr.bf16.mxu0 0
  %481 = vmatpush1.bf16.msra.mxu0 %v397
  %482 = vmatprep.subr.bf16.mxu0 0
  %483 = vmatpush1.bf16.msra.mxu0 %v396
  %484 = vmatprep.subr.bf16.mxu0 0
  %485 = vmatpush1.bf16.msra.mxu0 %v395
  %486 = vmatprep.subr.bf16.mxu0 0
  %487 = vmatpush1.bf16.msra.mxu0 %v394
  %488 = vmatprep.subr.bf16.mxu0 0
  %489 = vmatpush1.bf16.msra.mxu0 %v393
  %490 = vmatprep.subr.bf16.mxu0 0
  %491 = vmatpush2.bf16.msra.mxu0 0
  %492 = vmatprep.subr.bf16.mxu0 0
  %493 = vmatpush2.bf16.msra.mxu0 0
  %494 = vmatprep.subr.bf16.mxu0 0
  %495 = vmatpush2.bf16.msra.mxu0 0
  %496 = vmatprep.subr.bf16.mxu0 0
  %497 = vmatpush2.bf16.msra.mxu0 0
  %498 = vmatprep.subr.bf16.mxu0 0
  %499 = vmatpush2.bf16.msra.mxu0 0
  %500 = vmatprep.subr.bf16.mxu0 0
  %501 = vmatpush2.bf16.msra.mxu0 0
  %502 = vmatprep.subr.bf16.mxu0 0
  %503 = vmatpush2.bf16.msra.mxu0 0
  %504 = vmatprep.subr.bf16.mxu0 0
  %505 = vmatpush2.bf16.msra.mxu0 0
  %506 = vmatprep.mubr.bf16.mxu0 0
  %507 = vmatmul.mubr.bf16.gmra.mxu0 %v228
  %v508 = vpop.f32.mrf.mxu0
  %v509 = vadd.f32 %v460, %v508
  %v510 = vpop.f32.mrf.mxu0
  %v511 = vpop.f32.mrf.mxu0
  %v512 = vadd.f32 %v463, %v511
  %v513 = vpop.f32.mrf.mxu0
  %514 = vmatprep.mubr.bf16.mxu0 0
  %515 = vmatmul.mubr.bf16.gmra.mxu0 %v229
  %v516 = vpop.f32.mrf.mxu0
  %v517 = vadd.f32 %v468, %v516
  %v518 = vpop.f32.mrf.mxu0
  %v519 = vpop.f32.mrf.mxu0
  %v520 = vadd.f32 %v471, %v519
  %v521 = vpop.f32.mrf.mxu0
  %522 = vdwg.mxu0
  %v524 = vlaneseq
  %v525 = vshrl.u32 %v524, 7
  %v526 = vsub.s32 0, %v525
  %v527 = vrot.slane %v232, %v526
  %v529 = vadd.f32 %v527, %v509
  %v530 = vadd.f32 %v527, %v512
  %v531 = vadd.f32 %v527, %v517
  %v532 = vadd.f32 %v527, %v520
  %v533 = vadd.f32 %v529, %v530
  %v534 = vadd.f32 %v533, %v531
  %v535 = vadd.f32 %v534, %v532
  %v536 = vrot.slane %v535, 4
  %v537 = vadd.f32 %v535, %v536
  %v538 = vrot.slane %v537, 2
  %v539 = vadd.f32 %v537, %v538
  %v540 = vrot.slane %v539, 1
  %v541 = vadd.f32 %v539, %v540
  %v542 = vmul.f32 %v529, %v529
  %v543 = vmul.f32 %v530, %v530
  %v544 = vmul.f32 %v531, %v531
  %v545 = vmul.f32 %v532, %v532
  %v546 = vadd.f32 %v542, %v543
  %v547 = vadd.f32 %v546, %v544
  %v548 = vadd.f32 %v547, %v545
  %v549 = vrot.slane %v548, 4
  %v550 = vadd.f32 %v548, %v549
  %v551 = vrot.slane %v550, 2
  %v552 = vadd.f32 %v550, %v551
  %v553 = vrot.slane %v552, 1
  %v554 = vadd.f32 %v552, %v553
  %vm555 = vcmask 1040384
  %v556 = vsel %vm555, %v541, %v554
  %v557 = vld [vmem:[%s5] sm:$0xff]
  %v558 = vld [vmem:[%s5 + $0x8] sm:$0xff]
  %v559 = vld [vmem:[%s5 + $0x10] sm:$0xff]
  %v560 = vld [vmem:[%s5 + $0x18] sm:$0xff]
  %v561 = vld [vmem:[%s5 + $0x20] sm:$0xff]
  %v562 = vld [vmem:[%s5 + $0x28] sm:$0xff]
  %v563 = vld [vmem:[%s5 + $0x30] sm:$0xff]
  %v564 = vld [vmem:[%s5 + $0x38] sm:$0xff]
  %v565 = vld [vmem:[%s5 + $0x40] sm:$0xff]
  %v566 = vld [vmem:[%s5 + $0x48] sm:$0xff]
  %v567 = vld [vmem:[%s5 + $0x50] sm:$0xff]
  %v568 = vld [vmem:[%s5 + $0x58] sm:$0xff]
  %v569 = vld [vmem:[%s5 + $0x60] sm:$0xff]
  %v570 = vld [vmem:[%s5 + $0x68] sm:$0xff]
  %v571 = vld [vmem:[%s5 + $0x70] sm:$0xff]
  %v572 = vld [vmem:[%s5 + $0x78] sm:$0xff]
  %573 = vmatprep.subr.mxu0 0.0
  %574 = vmatpush1.msra.mxu0 %v572
  %575 = vmatprep.subr.mxu0 0.0
  %576 = vmatpush1.msra.mxu0 %v571
  %577 = vmatprep.subr.mxu0 0.0
  %578 = vmatpush1.msra.mxu0 %v570
  %579 = vmatprep.subr.mxu0 0.0
  %580 = vmatpush1.msra.mxu0 %v569
  %581 = vmatprep.subr.mxu0 0.0
  %582 = vmatpush1.msra.mxu0 %v568
  %583 = vmatprep.subr.mxu0 0.0
  %584 = vmatpush1.msra.mxu0 %v567
  %585 = vmatprep.subr.mxu0 0.0
  %586 = vmatpush1.msra.mxu0 %v566
  %587 = vmatprep.subr.mxu0 0.0
  %588 = vmatpush1.msra.mxu0 %v565
  %589 = vmatprep.subr.mxu0 0.0
  %590 = vmatpush1.msra.mxu0 %v564
  %591 = vmatprep.subr.mxu0 0.0
  %592 = vmatpush1.msra.mxu0 %v563
  %593 = vmatprep.subr.mxu0 0.0
  %594 = vmatpush1.msra.mxu0 %v562
  %595 = vmatprep.subr.mxu0 0.0
  %596 = vmatpush1.msra.mxu0 %v561
  %597 = vmatprep.subr.mxu0 0.0
  %598 = vmatpush1.msra.mxu0 %v560
  %599 = vmatprep.subr.mxu0 0.0
  %600 = vmatpush1.msra.mxu0 %v559
  %601 = vmatprep.subr.mxu0 0.0
  %602 = vmatpush1.msra.mxu0 %v558
  %603 = vmatprep.subr.mxu0 0.0
  %604 = vmatpush1.msra.mxu0 %v557
  %605 = vmatprep.subr.mxu0 0.0
  %606 = vmatpush2.msra.mxu0 0.0
  %607 = vmatprep.subr.mxu0 0.0
  %608 = vmatpush2.msra.mxu0 0.0
  %609 = vmatprep.subr.mxu0 0.0
  %610 = vmatpush2.msra.mxu0 0.0
  %611 = vmatprep.subr.mxu0 0.0
  %612 = vmatpush2.msra.mxu0 0.0
  %613 = vmatprep.subr.mxu0 0.0
  %614 = vmatpush2.msra.mxu0 0.0
  %615 = vmatprep.subr.mxu0 0.0
  %616 = vmatpush2.msra.mxu0 0.0
  %617 = vmatprep.subr.mxu0 0.0
  %618 = vmatpush2.msra.mxu0 0.0
  %619 = vmatprep.subr.mxu0 0.0
  %620 = vmatpush2.msra.mxu0 0.0
  %621 = vmatprep.subr.mxu0 0.0
  %622 = vmatpush2.msra.mxu0 0.0
  %623 = vmatprep.subr.mxu0 0.0
  %624 = vmatpush2.msra.mxu0 0.0
  %625 = vmatprep.subr.mxu0 0.0
  %626 = vmatpush2.msra.mxu0 0.0
  %627 = vmatprep.subr.mxu0 0.0
  %628 = vmatpush2.msra.mxu0 0.0
  %629 = vmatprep.subr.mxu0 0.0
  %630 = vmatpush2.msra.mxu0 0.0
  %631 = vmatprep.subr.mxu0 0.0
  %632 = vmatpush2.msra.mxu0 0.0
  %633 = vmatprep.subr.mxu0 0.0
  %634 = vmatpush2.msra.mxu0 0.0
  %635 = vmatprep.subr.mxu0 0.0
  %636 = vmatpush2.msra.mxu0 0.0
  %637 = vmatprep.mubr.f32.mxu0 0.0
  %638 = vmatmul.mubr.f32.gmra.mxu0 %v556
  %v639 = vpop.f32.mrf.mxu0
  %v640 = vadd.f32 0.0, %v639
  %v641 = vpop.f32.mrf.mxu0
  %642 = vdwg.mxu0
  %v643 = vmul.f32 %v640, 0.001953125
  %v644 = vmul.f32 %v643, %v643
  %v646 = vrot.slane %v644, 7
  %v648 = vsub.f32 %v643, %v646
  %v649 = vmax.f32 %v648, 0.0
  %v650 = vld [vmem:[%s3] sm:$0x1]
  %v651 = vadd.f32 %v649, 1e-05
  %v652 = vrsqrt.pop %v651
  %v655 = vunpack.c.l.s4 1966171168
  %v656 = vunpack.c.0.s8 %v655
  %v657 = vlaneseq
  %v658 = vshrl.u32 %v657, 7
  %v659 = vsub.s32 %v656, %v658
  %v660 = vrot.slane %v652, %v659
  %v661 = vcombine.high %v660, %v660
  %v663 = vunpack.c.l.s4 1966171168
  %v664 = vunpack.c.0.s8 %v663
  %v665 = vlaneseq
  %v666 = vshrl.u32 %v665, 7
  %v667 = vsub.s32 %v664, %v666
  %v668 = vrot.slane %v661, %v667
  %v670 = vmul.f32 %v650, %v668
  %v671 = vld [vmem:[%s4] sm:$0x1]
  %v672 = vmul.f32 %v643, %v670
  %v673 = vsub.f32 %v671, %v672
  %v675 = vlaneseq
  %v676 = vshrl.u32 %v675, 7
  %v677 = vsub.s32 0, %v676
  %v678 = vrot.slane %v673, %v677
  %v680 = vsel %vm555, %v670, %v678
  %v681 = vld [vmem:[%s6] sm:$0xff]
  %vm682 = vcmask 64512
  %v684 = vsel %vm682, %v680, 0
  %686 = vmatprep.subr.mxu0 0.0
  %687 = vmatpush1.msra.mxu0 0.0
  %688 = vmatprep.subr.mxu0 0.0
  %689 = vmatpush1.msra.mxu0 0.0
  %690 = vmatprep.subr.mxu0 0.0
  %691 = vmatpush1.msra.mxu0 0.0
  %692 = vmatprep.subr.mxu0 0.0
  %693 = vmatpush1.msra.mxu0 0.0
  %694 = vmatprep.subr.mxu0 0.0
  %695 = vmatpush1.msra.mxu0 0.0
  %696 = vmatprep.subr.mxu0 0.0
  %697 = vmatpush1.msra.mxu0 0.0
  %698 = vmatprep.subr.mxu0 0.0
  %699 = vmatpush1.msra.mxu0 0.0
  %700 = vmatprep.subr.mxu0 0.0
  %701 = vmatpush1.msra.mxu0 0.0
  %702 = vmatprep.subr.mxu0 0.0
  %703 = vmatpush1.msra.mxu0 0.0
  %704 = vmatprep.subr.mxu0 0.0
  %705 = vmatpush1.msra.mxu0 0.0
  %706 = vmatprep.subr.mxu0 0.0
  %707 = vmatpush1.msra.mxu0 0.0
  %708 = vmatprep.subr.mxu0 0.0
  %709 = vmatpush1.msra.mxu0 0.0
  %710 = vmatprep.subr.mxu0 0.0
  %711 = vmatpush1.msra.mxu0 0.0
  %712 = vmatprep.subr.mxu0 0.0
  %713 = vmatpush1.msra.mxu0 0.0
  %714 = vmatprep.subr.mxu0 0.0
  %715 = vmatpush1.msra.mxu0 0.0
  %716 = vmatprep.subr.mxu0 0.0
  %717 = vmatpush1.msra.mxu0 %v681
  %718 = vmatprep.subr.mxu0 0.0
  %719 = vmatpush2.msra.mxu0 0.0
  %720 = vmatprep.subr.mxu0 0.0
  %721 = vmatpush2.msra.mxu0 0.0
  %722 = vmatprep.subr.mxu0 0.0
  %723 = vmatpush2.msra.mxu0 0.0
  %724 = vmatprep.subr.mxu0 0.0
  %725 = vmatpush2.msra.mxu0 0.0
  %726 = vmatprep.subr.mxu0 0.0
  %727 = vmatpush2.msra.mxu0 0.0
  %728 = vmatprep.subr.mxu0 0.0
  %729 = vmatpush2.msra.mxu0 0.0
  %730 = vmatprep.subr.mxu0 0.0
  %731 = vmatpush2.msra.mxu0 0.0
  %732 = vmatprep.subr.mxu0 0.0
  %733 = vmatpush2.msra.mxu0 0.0
  %734 = vmatprep.subr.mxu0 0.0
  %735 = vmatpush2.msra.mxu0 0.0
  %736 = vmatprep.subr.mxu0 0.0
  %737 = vmatpush2.msra.mxu0 0.0
  %738 = vmatprep.subr.mxu0 0.0
  %739 = vmatpush2.msra.mxu0 0.0
  %740 = vmatprep.subr.mxu0 0.0
  %741 = vmatpush2.msra.mxu0 0.0
  %742 = vmatprep.subr.mxu0 0.0
  %743 = vmatpush2.msra.mxu0 0.0
  %744 = vmatprep.subr.mxu0 0.0
  %745 = vmatpush2.msra.mxu0 0.0
  %746 = vmatprep.subr.mxu0 0.0
  %747 = vmatpush2.msra.mxu0 0.0
  %748 = vmatprep.subr.mxu0 0.0
  %749 = vmatpush2.msra.mxu0 0.0
  %750 = vmatprep.mubr.f32.mxu0 0.0
  %751 = vmatmul.mubr.f32.gmra.mxu0 %v684
  %v752 = vpop.f32.mrf.mxu0
  %v753 = vadd.f32 0.0, %v752
  %v754 = vpop.f32.mrf.mxu0
  %755 = vdwg.mxu0
  %v756 = vlaneseq
  %v757 = vshrl.u32 %v756, 7
  %v758 = vsub.s32 0, %v757
  %v759 = vrot.slane %v753, %v758
  %v760 = vmul.f32 %v529, %v759
  %v761 = vmul.f32 %v530, %v759
  %v762 = vmul.f32 %v531, %v759
  %v763 = vmul.f32 %v532, %v759
  %v764 = vlaneseq
  %v765 = vshrl.u32 %v764, 7
  %v766 = vsub.s32 1, %v765
  %v767 = vrot.slane %v753, %v766
  %v768 = vadd.f32 %v760, %v767
  %v769 = vadd.f32 %v761, %v767
  %v770 = vadd.f32 %v762, %v767
  %v771 = vadd.f32 %v763, %v767
  %v772 = vmax.f32 %v768, 0.0
  %v773 = vmax.f32 %v769, 0.0
  %v774 = vmax.f32 %v770, 0.0
  %v775 = vmax.f32 %v771, 0.0
  %v776 = vpack.c.bf16 %v773, %v772
  %v777 = vpack.c.bf16 %v775, %v774
  %v778 = vld [vmem:[#allocation3] sm:$0x1]
  %v779 = vsel %vm47, 0, %v778
  %780 = vst [vmem:[#allocation3] sm:$0x1] %v779
  %v781 = vld [vmem:[#allocation3 + $0xc] sm:$0x1]
  %v782 = vsel %vm47, 0, %v781
  %783 = vst [vmem:[#allocation3 + $0xc] sm:$0x1] %v782
  %v784 = vld [vmem:[#allocation3 + $0x8] sm:$0x1]
  %v785 = vsel %vm55, 0, %v784
  %786 = vst [vmem:[#allocation3 + $0x8] sm:$0x1] %v785
  %v787 = vld [vmem:[#allocation3 + $0x14] sm:$0x1]
  %v788 = vsel %vm55, 0, %v787
  %789 = vst [vmem:[#allocation3 + $0x14] sm:$0x1] %v788
  %v792 = vunpack.c.l.b16 %v776
  %v793 = vunpack.c.h.b16 %v776
  %v794 = vunpack.c.l.b16 %v777
  %v795 = vunpack.c.h.b16 %v777
  %v796 = vpack.c.b16 %v792, %v792
  %v797 = vpack.c.b16 %v793, %v793
  %v798 = vpack.c.b16 %v794, %v794
  %v799 = vpack.c.b16 %v795, %v795
  %v801 = vshrl.u32 %v796, 16
  %v803 = vrot.slane %v801, 7
  %v804 = vshll.u32 %v796, 16
  %v806 = vor.u32 %v803, %v804
  %v807 = vrot.slane %v803, 4
  %v809 = vshrl.u32 %v797, 16
  %v811 = vrot.slane %v809, 7
  %v812 = vshll.u32 %v797, 16
  %v814 = vor.u32 %v811, %v812
  %v815 = vsel %vm67, %v807, %v814
  %v816 = vrot.slane %v811, 4
  %v818 = vshrl.u32 %v798, 16
  %v820 = vrot.slane %v818, 7
  %v821 = vshll.u32 %v798, 16
  %v823 = vor.u32 %v820, %v821
  %v824 = vrot.slane %v820, 4
  %v826 = vshrl.u32 %v799, 16
  %v828 = vrot.slane %v826, 7
  %v829 = vshll.u32 %v799, 16
  %v831 = vor.u32 %v828, %v829
  %v832 = vsel %vm67, %v824, %v831
  %v833 = vrot.slane %v828, 4
  %v840 = vld [vmem:[#allocation3] sm:$0xf]
  %v841 = vsel %vm109, %v806, %v840
  %842 = vst [vmem:[#allocation3] sm:$0xf] %v841
  %843 = vst [vmem:[#allocation3 + $0x4] sm:$0xf] %v815
  %v844 = vld [vmem:[#allocation3 + $0x8] sm:$0x1]
  %v845 = vsel %vm47, %v816, %v844
  %846 = vst [vmem:[#allocation3 + $0x8] sm:$0x1] %v845
  %v847 = vld [vmem:[#allocation3 + $0xc] sm:$0xf]
  %v848 = vsel %vm109, %v823, %v847
  %849 = vst [vmem:[#allocation3 + $0xc] sm:$0xf] %v848
  %850 = vst [vmem:[#allocation3 + $0x10] sm:$0xf] %v832
  %v851 = vld [vmem:[#allocation3 + $0x14] sm:$0x1]
  %v852 = vsel %vm47, %v833, %v851
  %853 = vst [vmem:[#allocation3 + $0x14] sm:$0x1] %v852
  %v854 = vld [vmem:[#allocation3] sm:$0xf]
  %v855 = vld [vmem:[#allocation3 + $0x4] sm:$0xf]
  %v856 = vld [vmem:[#allocation3 + $0xc] sm:$0xf]
  %v857 = vld [vmem:[#allocation3 + $0x10] sm:$0xf]
  %v858 = vld [vmem:[#allocation3] sm:$0xe]
  %v859 = vld [vmem:[#allocation3 + $0x8] sm:$0x1]
  %v860 = vld [vmem:[#allocation3 + $0xc] sm:$0xe]
  %v861 = vld [vmem:[#allocation3 + $0x14] sm:$0x1]
  %v868 = vrot.slane %v858, 5
  %v869 = vrot.slane %v868, 4
  %v870 = vrot.slane %v855, 5
  %v871 = vsel %vm191, %v869, %v870
  %v872 = vrot.slane %v870, 4
  %v873 = vrot.slane %v859, 5
  %v874 = vsel %vm191, %v872, %v873
  %v875 = vrot.slane %v860, 5
  %v876 = vrot.slane %v875, 4
  %v877 = vrot.slane %v857, 5
  %v878 = vsel %vm191, %v876, %v877
  %v879 = vrot.slane %v877, 4
  %v880 = vrot.slane %v861, 5
  %v881 = vsel %vm191, %v879, %v880
  %v884 = vunpack.c.l.b16 %v854
  %v885 = vunpack.c.l.b16 %v855
  %v886 = vunpack.c.l.b16 %v856
  %v887 = vunpack.c.l.b16 %v857
  %v888 = vpack.c.b16 %v885, %v884
  %v889 = vpack.c.b16 %v887, %v886
  %v892 = vunpack.c.l.b16 %v871
  %v893 = vunpack.c.l.b16 %v874
  %v894 = vunpack.c.l.b16 %v878
  %v895 = vunpack.c.l.b16 %v881
  %v896 = vpack.c.b16 %v893, %v892
  %v897 = vpack.c.b16 %v895, %v894
  %v900 = vld [vmem:[%s8] sm:$0x1]
  %v901 = vld [vmem:[%s7] sm:$0xf]
  %v902 = vld [vmem:[%s7 + $0x4] sm:$0xf]
  %v903 = vld [vmem:[%s7 + $0x8] sm:$0xf]
  %v904 = vld [vmem:[%s7 + $0xc] sm:$0xf]
  %v905 = vld [vmem:[%s7 + $0x10] sm:$0xf]
  %v906 = vld [vmem:[%s7 + $0x14] sm:$0xf]
  %v907 = vld [vmem:[%s7 + $0x18] sm:$0xf]
  %v908 = vld [vmem:[%s7 + $0x1c] sm:$0xf]
  %v909 = vld [vmem:[%s7 + $0x20] sm:$0xf]
  %v910 = vld [vmem:[%s7 + $0x24] sm:$0xf]
  %v911 = vld [vmem:[%s7 + $0x28] sm:$0xf]
  %v912 = vld [vmem:[%s7 + $0x2c] sm:$0xf]
  %v913 = vld [vmem:[%s7 + $0x30] sm:$0xf]
  %v914 = vld [vmem:[%s7 + $0x34] sm:$0xf]
  %v915 = vld [vmem:[%s7 + $0x38] sm:$0xf]
  %v916 = vld [vmem:[%s7 + $0x3c] sm:$0xf]
  %v917 = vld [vmem:[%s7 + $0x40] sm:$0xf]
  %v918 = vld [vmem:[%s7 + $0x44] sm:$0xf]
  %v919 = vld [vmem:[%s7 + $0x48] sm:$0xf]
  %v920 = vld [vmem:[%s7 + $0x4c] sm:$0xf]
  %v921 = vld [vmem:[%s7 + $0x50] sm:$0xf]
  %v922 = vld [vmem:[%s7 + $0x54] sm:$0xf]
  %v923 = vld [vmem:[%s7 + $0x58] sm:$0xf]
  %v924 = vld [vmem:[%s7 + $0x5c] sm:$0xf]
  %v925 = vld [vmem:[%s7 + $0x60] sm:$0xf]
  %v926 = vld [vmem:[%s7 + $0x64] sm:$0xf]
  %v927 = vld [vmem:[%s7 + $0x68] sm:$0xf]
  %v928 = vld [vmem:[%s7 + $0x6c] sm:$0xf]
  %v929 = vld [vmem:[%s7 + $0x70] sm:$0xf]
  %v930 = vld [vmem:[%s7 + $0x74] sm:$0xf]
  %v931 = vld [vmem:[%s7 + $0x78] sm:$0xf]
  %v932 = vld [vmem:[%s7 + $0x7c] sm:$0xf]
  %v933 = vld [vmem:[%s7 + $0x80] sm:$0xf]
  %v934 = vld [vmem:[%s7 + $0x84] sm:$0xf]
  %v935 = vld [vmem:[%s7 + $0x88] sm:$0xf]
  %v936 = vld [vmem:[%s7 + $0x8c] sm:$0xf]
  %v937 = vld [vmem:[%s7 + $0x90] sm:$0xf]
  %v938 = vld [vmem:[%s7 + $0x94] sm:$0xf]
  %v939 = vld [vmem:[%s7 + $0x98] sm:$0xf]
  %v940 = vld [vmem:[%s7 + $0x9c] sm:$0xf]
  %v941 = vld [vmem:[%s7 + $0xa0] sm:$0xf]
  %v942 = vld [vmem:[%s7 + $0xa4] sm:$0xf]
  %v943 = vld [vmem:[%s7 + $0xa8] sm:$0xf]
  %v944 = vld [vmem:[%s7 + $0xac] sm:$0xf]
  %v945 = vld [vmem:[%s7 + $0xb0] sm:$0xf]
  %v946 = vld [vmem:[%s7 + $0xb4] sm:$0xf]
  %v947 = vld [vmem:[%s7 + $0xb8] sm:$0xf]
  %v948 = vld [vmem:[%s7 + $0xbc] sm:$0xf]
  %v997 = vunpack.c.l.b16 %v901
  %v998 = vunpack.c.l.b16 %v902
  %v999 = vunpack.c.l.b16 %v903
  %v1000 = vunpack.c.l.b16 %v904
  %v1001 = vunpack.c.l.b16 %v905
  %v1002 = vunpack.c.l.b16 %v906
  %v1003 = vunpack.c.l.b16 %v907
  %v1004 = vunpack.c.l.b16 %v908
  %v1005 = vunpack.c.l.b16 %v909
  %v1006 = vunpack.c.l.b16 %v910
  %v1007 = vunpack.c.l.b16 %v911
  %v1008 = vunpack.c.l.b16 %v912
  %v1009 = vunpack.c.l.b16 %v913
  %v1010 = vunpack.c.l.b16 %v914
  %v1011 = vunpack.c.l.b16 %v915
  %v1012 = vunpack.c.l.b16 %v916
  %v1013 = vunpack.c.l.b16 %v917
  %v1014 = vunpack.c.l.b16 %v918
  %v1015 = vunpack.c.l.b16 %v919
  %v1016 = vunpack.c.l.b16 %v920
  %v1017 = vunpack.c.l.b16 %v921
  %v1018 = vunpack.c.l.b16 %v922
  %v1019 = vunpack.c.l.b16 %v923
  %v1020 = vunpack.c.l.b16 %v924
  %v1021 = vunpack.c.l.b16 %v925
  %v1022 = vunpack.c.l.b16 %v926
  %v1023 = vunpack.c.l.b16 %v927
  %v1024 = vunpack.c.l.b16 %v928
  %v1025 = vunpack.c.l.b16 %v929
  %v1026 = vunpack.c.l.b16 %v930
  %v1027 = vunpack.c.l.b16 %v931
  %v1028 = vunpack.c.l.b16 %v932
  %v1029 = vunpack.c.l.b16 %v933
  %v1030 = vunpack.c.l.b16 %v934
  %v1031 = vunpack.c.l.b16 %v935
  %v1032 = vunpack.c.l.b16 %v936
  %v1033 = vunpack.c.l.b16 %v937
  %v1034 = vunpack.c.l.b16 %v938
  %v1035 = vunpack.c.l.b16 %v939
  %v1036 = vunpack.c.l.b16 %v940
  %v1037 = vunpack.c.l.b16 %v941
  %v1038 = vunpack.c.l.b16 %v942
  %v1039 = vunpack.c.l.b16 %v943
  %v1040 = vunpack.c.l.b16 %v944
  %v1041 = vunpack.c.l.b16 %v945
  %v1042 = vunpack.c.l.b16 %v946
  %v1043 = vunpack.c.l.b16 %v947
  %v1044 = vunpack.c.l.b16 %v948
  %v1045 = vpack.c.b16 %v998, %v997
  %v1046 = vpack.c.b16 %v1000, %v999
  %v1047 = vpack.c.b16 %v1002, %v1001
  %v1048 = vpack.c.b16 %v1004, %v1003
  %v1049 = vpack.c.b16 %v1006, %v1005
  %v1050 = vpack.c.b16 %v1008, %v1007
  %v1051 = vpack.c.b16 %v1010, %v1009
  %v1052 = vpack.c.b16 %v1012, %v1011
  %v1053 = vpack.c.b16 %v1014, %v1013
  %v1054 = vpack.c.b16 %v1016, %v1015
  %v1055 = vpack.c.b16 %v1018, %v1017
  %v1056 = vpack.c.b16 %v1020, %v1019
  %v1057 = vpack.c.b16 %v1022, %v1021
  %v1058 = vpack.c.b16 %v1024, %v1023
  %v1059 = vpack.c.b16 %v1026, %v1025
  %v1060 = vpack.c.b16 %v1028, %v1027
  %v1061 = vpack.c.b16 %v1030, %v1029
  %v1062 = vpack.c.b16 %v1032, %v1031
  %v1063 = vpack.c.b16 %v1034, %v1033
  %v1064 = vpack.c.b16 %v1036, %v1035
  %v1065 = vpack.c.b16 %v1038, %v1037
  %v1066 = vpack.c.b16 %v1040, %v1039
  %v1067 = vpack.c.b16 %v1042, %v1041
  %v1068 = vpack.c.b16 %v1044, %v1043
  %1093 = vmatprep.subr.bf16.mxu0 0
  %1094 = vmatpush1.bf16.msra.mxu0 %v1052
  %1095 = vmatprep.subr.bf16.mxu0 0
  %1096 = vmatpush1.bf16.msra.mxu0 %v1051
  %1097 = vmatprep.subr.bf16.mxu0 0
  %1098 = vmatpush1.bf16.msra.mxu0 %v1050
  %1099 = vmatprep.subr.bf16.mxu0 0
  %1100 = vmatpush1.bf16.msra.mxu0 %v1049
  %1101 = vmatprep.subr.bf16.mxu0 0
  %1102 = vmatpush1.bf16.msra.mxu0 %v1048
  %1103 = vmatprep.subr.bf16.mxu0 0
  %1104 = vmatpush1.bf16.msra.mxu0 %v1047
  %1105 = vmatprep.subr.bf16.mxu0 0
  %1106 = vmatpush1.bf16.msra.mxu0 %v1046
  %1107 = vmatprep.subr.bf16.mxu0 0
  %1108 = vmatpush1.bf16.msra.mxu0 %v1045
  %1109 = vmatprep.subr.bf16.mxu0 0
  %1110 = vmatpush2.bf16.msra.mxu0 %v1060
  %1111 = vmatprep.subr.bf16.mxu0 0
  %1112 = vmatpush2.bf16.msra.mxu0 %v1059
  %1113 = vmatprep.subr.bf16.mxu0 0
  %1114 = vmatpush2.bf16.msra.mxu0 %v1058
  %1115 = vmatprep.subr.bf16.mxu0 0
  %1116 = vmatpush2.bf16.msra.mxu0 %v1057
  %1117 = vmatprep.subr.bf16.mxu0 0
  %1118 = vmatpush2.bf16.msra.mxu0 %v1056
  %1119 = vmatprep.subr.bf16.mxu0 0
  %1120 = vmatpush2.bf16.msra.mxu0 %v1055
  %1121 = vmatprep.subr.bf16.mxu0 0
  %1122 = vmatpush2.bf16.msra.mxu0 %v1054
  %1123 = vmatprep.subr.bf16.mxu0 0
  %1124 = vmatpush2.bf16.msra.mxu0 %v1053
  %1125 = vmatprep.mubr.bf16.mxu0 %v776
  %1126 = vmatmul.mubr.bf16.gmra.mxu0 %v888
  %v1127 = vpop.f32.mrf.mxu0
  %v1128 = vadd.f32 0.0, %v1127
  %v1129 = vpop.f32.mrf.mxu0
  %v1130 = vpop.f32.mrf.mxu0
  %v1131 = vadd.f32 0.0, %v1130
  %v1132 = vpop.f32.mrf.mxu0
  %1133 = vmatprep.mubr.bf16.mxu0 %v777
  %1134 = vmatmul.mubr.bf16.gmra.mxu0 %v889
  %v1135 = vpop.f32.mrf.mxu0
  %v1136 = vadd.f32 0.0, %v1135
  %v1137 = vpop.f32.mrf.mxu0
  %v1138 = vpop.f32.mrf.mxu0
  %v1139 = vadd.f32 0.0, %v1138
  %v1140 = vpop.f32.mrf.mxu0
  %1141 = vdwg.mxu0
  %1142 = vmatprep.subr.bf16.mxu0 0
  %1143 = vmatpush1.bf16.msra.mxu0 %v1068
  %1144 = vmatprep.subr.bf16.mxu0 0
  %1145 = vmatpush1.bf16.msra.mxu0 %v1067
  %1146 = vmatprep.subr.bf16.mxu0 0
  %1147 = vmatpush1.bf16.msra.mxu0 %v1066
  %1148 = vmatprep.subr.bf16.mxu0 0
  %1149 = vmatpush1.bf16.msra.mxu0 %v1065
  %1150 = vmatprep.subr.bf16.mxu0 0
  %1151 = vmatpush1.bf16.msra.mxu0 %v1064
  %1152 = vmatprep.subr.bf16.mxu0 0
  %1153 = vmatpush1.bf16.msra.mxu0 %v1063
  %1154 = vmatprep.subr.bf16.mxu0 0
  %1155 = vmatpush1.bf16.msra.mxu0 %v1062
  %1156 = vmatprep.subr.bf16.mxu0 0
  %1157 = vmatpush1.bf16.msra.mxu0 %v1061
  %1158 = vmatprep.subr.bf16.mxu0 0
  %1159 = vmatpush2.bf16.msra.mxu0 0
  %1160 = vmatprep.subr.bf16.mxu0 0
  %1161 = vmatpush2.bf16.msra.mxu0 0
  %1162 = vmatprep.subr.bf16.mxu0 0
  %1163 = vmatpush2.bf16.msra.mxu0 0
  %1164 = vmatprep.subr.bf16.mxu0 0
  %1165 = vmatpush2.bf16.msra.mxu0 0
  %1166 = vmatprep.subr.bf16.mxu0 0
  %1167 = vmatpush2.bf16.msra.mxu0 0
  %1168 = vmatprep.subr.bf16.mxu0 0
  %1169 = vmatpush2.bf16.msra.mxu0 0
  %1170 = vmatprep.subr.bf16.mxu0 0
  %1171 = vmatpush2.bf16.msra.mxu0 0
  %1172 = vmatprep.subr.bf16.mxu0 0
  %1173 = vmatpush2.bf16.msra.mxu0 0
  %1174 = vmatprep.mubr.bf16.mxu0 0
  %1175 = vmatmul.mubr.bf16.gmra.mxu0 %v896
  %v1176 = vpop.f32.mrf.mxu0
  %v1177 = vadd.f32 %v1128, %v1176
  %v1178 = vpop.f32.mrf.mxu0
  %v1179 = vpop.f32.mrf.mxu0
  %v1180 = vadd.f32 %v1131, %v1179
  %v1181 = vpop.f32.mrf.mxu0
  %1182 = vmatprep.mubr.bf16.mxu0 0
  %1183 = vmatmul.mubr.bf16.gmra.mxu0 %v897
  %v1184 = vpop.f32.mrf.mxu0
  %v1185 = vadd.f32 %v1136, %v1184
  %v1186 = vpop.f32.mrf.mxu0
  %v1187 = vpop.f32.mrf.mxu0
  %v1188 = vadd.f32 %v1139, %v1187
  %v1189 = vpop.f32.mrf.mxu0
  %1190 = vdwg.mxu0
  %v1192 = vlaneseq
  %v1193 = vshrl.u32 %v1192, 7
  %v1194 = vsub.s32 0, %v1193
  %v1195 = vrot.slane %v900, %v1194
  %v1197 = vadd.f32 %v1195, %v1177
  %v1198 = vadd.f32 %v1195, %v1180
  %v1199 = vadd.f32 %v1195, %v1185
  %v1200 = vadd.f32 %v1195, %v1188
  %v1201 = vadd.f32 %v1197, %v1198
  %v1202 = vadd.f32 %v1201, %v1199
  %v1203 = vadd.f32 %v1202, %v1200
  %v1204 = vrot.slane %v1203, 4
  %v1205 = vadd.f32 %v1203, %v1204
  %v1206 = vrot.slane %v1205, 2
  %v1207 = vadd.f32 %v1205, %v1206
  %v1208 = vrot.slane %v1207, 1
  %v1209 = vadd.f32 %v1207, %v1208
  %v1210 = vmul.f32 %v1197, %v1197
  %v1211 = vmul.f32 %v1198, %v1198
  %v1212 = vmul.f32 %v1199, %v1199
  %v1213 = vmul.f32 %v1200, %v1200
  %v1214 = vadd.f32 %v1210, %v1211
  %v1215 = vadd.f32 %v1214, %v1212
  %v1216 = vadd.f32 %v1215, %v1213
  %v1217 = vrot.slane %v1216, 4
  %v1218 = vadd.f32 %v1216, %v1217
  %v1219 = vrot.slane %v1218, 2
  %v1220 = vadd.f32 %v1218, %v1219
  %v1221 = vrot.slane %v1220, 1
  %v1222 = vadd.f32 %v1220, %v1221
  %v1223 = vsel %vm555, %v1209, %v1222
  %v1224 = vld [vmem:[%s11] sm:$0xff]
  %v1225 = vld [vmem:[%s11 + $0x8] sm:$0xff]
  %v1226 = vld [vmem:[%s11 + $0x10] sm:$0xff]
  %v1227 = vld [vmem:[%s11 + $0x18] sm:$0xff]
  %v1228 = vld [vmem:[%s11 + $0x20] sm:$0xff]
  %v1229 = vld [vmem:[%s11 + $0x28] sm:$0xff]
  %v1230 = vld [vmem:[%s11 + $0x30] sm:$0xff]
  %v1231 = vld [vmem:[%s11 + $0x38] sm:$0xff]
  %v1232 = vld [vmem:[%s11 + $0x40] sm:$0xff]
  %v1233 = vld [vmem:[%s11 + $0x48] sm:$0xff]
  %v1234 = vld [vmem:[%s11 + $0x50] sm:$0xff]
  %v1235 = vld [vmem:[%s11 + $0x58] sm:$0xff]
  %v1236 = vld [vmem:[%s11 + $0x60] sm:$0xff]
  %v1237 = vld [vmem:[%s11 + $0x68] sm:$0xff]
  %v1238 = vld [vmem:[%s11 + $0x70] sm:$0xff]
  %v1239 = vld [vmem:[%s11 + $0x78] sm:$0xff]
  %1240 = vmatprep.subr.mxu0 0.0
  %1241 = vmatpush1.msra.mxu0 %v1239
  %1242 = vmatprep.subr.mxu0 0.0
  %1243 = vmatpush1.msra.mxu0 %v1238
  %1244 = vmatprep.subr.mxu0 0.0
  %1245 = vmatpush1.msra.mxu0 %v1237
  %1246 = vmatprep.subr.mxu0 0.0
  %1247 = vmatpush1.msra.mxu0 %v1236
  %1248 = vmatprep.subr.mxu0 0.0
  %1249 = vmatpush1.msra.mxu0 %v1235
  %1250 = vmatprep.subr.mxu0 0.0
  %1251 = vmatpush1.msra.mxu0 %v1234
  %1252 = vmatprep.subr.mxu0 0.0
  %1253 = vmatpush1.msra.mxu0 %v1233
  %1254 = vmatprep.subr.mxu0 0.0
  %1255 = vmatpush1.msra.mxu0 %v1232
  %1256 = vmatprep.subr.mxu0 0.0
  %1257 = vmatpush1.msra.mxu0 %v1231
  %1258 = vmatprep.subr.mxu0 0.0
  %1259 = vmatpush1.msra.mxu0 %v1230
  %1260 = vmatprep.subr.mxu0 0.0
  %1261 = vmatpush1.msra.mxu0 %v1229
  %1262 = vmatprep.subr.mxu0 0.0
  %1263 = vmatpush1.msra.mxu0 %v1228
  %1264 = vmatprep.subr.mxu0 0.0
  %1265 = vmatpush1.msra.mxu0 %v1227
  %1266 = vmatprep.subr.mxu0 0.0
  %1267 = vmatpush1.msra.mxu0 %v1226
  %1268 = vmatprep.subr.mxu0 0.0
  %1269 = vmatpush1.msra.mxu0 %v1225
  %1270 = vmatprep.subr.mxu0 0.0
  %1271 = vmatpush1.msra.mxu0 %v1224
  %1272 = vmatprep.subr.mxu0 0.0
  %1273 = vmatpush2.msra.mxu0 0.0
  %1274 = vmatprep.subr.mxu0 0.0
  %1275 = vmatpush2.msra.mxu0 0.0
  %1276 = vmatprep.subr.mxu0 0.0
  %1277 = vmatpush2.msra.mxu0 0.0
  %1278 = vmatprep.subr.mxu0 0.0
  %1279 = vmatpush2.msra.mxu0 0.0
  %1280 = vmatprep.subr.mxu0 0.0
  %1281 = vmatpush2.msra.mxu0 0.0
  %1282 = vmatprep.subr.mxu0 0.0
  %1283 = vmatpush2.msra.mxu0 0.0
  %1284 = vmatprep.subr.mxu0 0.0
  %1285 = vmatpush2.msra.mxu0 0.0
  %1286 = vmatprep.subr.mxu0 0.0
  %1287 = vmatpush2.msra.mxu0 0.0
  %1288 = vmatprep.subr.mxu0 0.0
  %1289 = vmatpush2.msra.mxu0 0.0
  %1290 = vmatprep.subr.mxu0 0.0
  %1291 = vmatpush2.msra.mxu0 0.0
  %1292 = vmatprep.subr.mxu0 0.0
  %1293 = vmatpush2.msra.mxu0 0.0
  %1294 = vmatprep.subr.mxu0 0.0
  %1295 = vmatpush2.msra.mxu0 0.0
  %1296 = vmatprep.subr.mxu0 0.0
  %1297 = vmatpush2.msra.mxu0 0.0
  %1298 = vmatprep.subr.mxu0 0.0
  %1299 = vmatpush2.msra.mxu0 0.0
  %1300 = vmatprep.subr.mxu0 0.0
  %1301 = vmatpush2.msra.mxu0 0.0
  %1302 = vmatprep.subr.mxu0 0.0
  %1303 = vmatpush2.msra.mxu0 0.0
  %1304 = vmatprep.mubr.f32.mxu0 0.0
  %1305 = vmatmul.mubr.f32.gmra.mxu0 %v1223
  %v1306 = vpop.f32.mrf.mxu0
  %v1307 = vadd.f32 0.0, %v1306
  %v1308 = vpop.f32.mrf.mxu0
  %1309 = vdwg.mxu0
  %v1310 = vmul.f32 %v1307, 0.001953125
  %v1311 = vmul.f32 %v1310, %v1310
  %v1313 = vrot.slane %v1311, 7
  %v1315 = vsub.f32 %v1310, %v1313
  %v1316 = vmax.f32 %v1315, 0.0
  %v1317 = vld [vmem:[%s9] sm:$0x1]
  %v1318 = vadd.f32 %v1316, 1e-05
  %v1319 = vrsqrt.pop %v1318
  %v1322 = vunpack.c.l.s4 1966171168
  %v1323 = vunpack.c.0.s8 %v1322
  %v1324 = vlaneseq
  %v1325 = vshrl.u32 %v1324, 7
  %v1326 = vsub.s32 %v1323, %v1325
  %v1327 = vrot.slane %v1319, %v1326
  %v1328 = vcombine.high %v1327, %v1327
  %v1330 = vunpack.c.l.s4 1966171168
  %v1331 = vunpack.c.0.s8 %v1330
  %v1332 = vlaneseq
  %v1333 = vshrl.u32 %v1332, 7
  %v1334 = vsub.s32 %v1331, %v1333
  %v1335 = vrot.slane %v1328, %v1334
  %v1337 = vmul.f32 %v1317, %v1335
  %v1338 = vld [vmem:[%s10] sm:$0x1]
  %v1339 = vmul.f32 %v1310, %v1337
  %v1340 = vsub.f32 %v1338, %v1339
  %v1342 = vlaneseq
  %v1343 = vshrl.u32 %v1342, 7
  %v1344 = vsub.s32 0, %v1343
  %v1345 = vrot.slane %v1340, %v1344
  %v1347 = vsel %vm555, %v1337, %v1345
  %v1348 = vld [vmem:[%s12] sm:$0xff]
  %v1350 = vsel %vm682, %v1347, 0
  %1352 = vmatprep.subr.mxu0 0.0
  %1353 = vmatpush1.msra.mxu0 0.0
  %1354 = vmatprep.subr.mxu0 0.0
  %1355 = vmatpush1.msra.mxu0 0.0
  %1356 = vmatprep.subr.mxu0 0.0
  %1357 = vmatpush1.msra.mxu0 0.0
  %1358 = vmatprep.subr.mxu0 0.0
  %1359 = vmatpush1.msra.mxu0 0.0
  %1360 = vmatprep.subr.mxu0 0.0
  %1361 = vmatpush1.msra.mxu0 0.0
  %1362 = vmatprep.subr.mxu0 0.0
  %1363 = vmatpush1.msra.mxu0 0.0
  %1364 = vmatprep.subr.mxu0 0.0
  %1365 = vmatpush1.msra.mxu0 0.0
  %1366 = vmatprep.subr.mxu0 0.0
  %1367 = vmatpush1.msra.mxu0 0.0
  %1368 = vmatprep.subr.mxu0 0.0
  %1369 = vmatpush1.msra.mxu0 0.0
  %1370 = vmatprep.subr.mxu0 0.0
  %1371 = vmatpush1.msra.mxu0 0.0
  %1372 = vmatprep.subr.mxu0 0.0
  %1373 = vmatpush1.msra.mxu0 0.0
  %1374 = vmatprep.subr.mxu0 0.0
  %1375 = vmatpush1.msra.mxu0 0.0
  %1376 = vmatprep.subr.mxu0 0.0
  %1377 = vmatpush1.msra.mxu0 0.0
  %1378 = vmatprep.subr.mxu0 0.0
  %1379 = vmatpush1.msra.mxu0 0.0
  %1380 = vmatprep.subr.mxu0 0.0
  %1381 = vmatpush1.msra.mxu0 0.0
  %1382 = vmatprep.subr.mxu0 0.0
  %1383 = vmatpush1.msra.mxu0 %v1348
  %1384 = vmatprep.subr.mxu0 0.0
  %1385 = vmatpush2.msra.mxu0 0.0
  %1386 = vmatprep.subr.mxu0 0.0
  %1387 = vmatpush2.msra.mxu0 0.0
  %1388 = vmatprep.subr.mxu0 0.0
  %1389 = vmatpush2.msra.mxu0 0.0
  %1390 = vmatprep.subr.mxu0 0.0
  %1391 = vmatpush2.msra.mxu0 0.0
  %1392 = vmatprep.subr.mxu0 0.0
  %1393 = vmatpush2.msra.mxu0 0.0
  %1394 = vmatprep.subr.mxu0 0.0
  %1395 = vmatpush2.msra.mxu0 0.0
  %1396 = vmatprep.subr.mxu0 0.0
  %1397 = vmatpush2.msra.mxu0 0.0
  %1398 = vmatprep.subr.mxu0 0.0
  %1399 = vmatpush2.msra.mxu0 0.0
  %1400 = vmatprep.subr.mxu0 0.0
  %1401 = vmatpush2.msra.mxu0 0.0
  %1402 = vmatprep.subr.mxu0 0.0
  %1403 = vmatpush2.msra.mxu0 0.0
  %1404 = vmatprep.subr.mxu0 0.0
  %1405 = vmatpush2.msra.mxu0 0.0
  %1406 = vmatprep.subr.mxu0 0.0
  %1407 = vmatpush2.msra.mxu0 0.0
  %1408 = vmatprep.subr.mxu0 0.0
  %1409 = vmatpush2.msra.mxu0 0.0
  %1410 = vmatprep.subr.mxu0 0.0
  %1411 = vmatpush2.msra.mxu0 0.0
  %1412 = vmatprep.subr.mxu0 0.0
  %1413 = vmatpush2.msra.mxu0 0.0
  %1414 = vmatprep.subr.mxu0 0.0
  %1415 = vmatpush2.msra.mxu0 0.0
  %1416 = vmatprep.mubr.f32.mxu0 0.0
  %1417 = vmatmul.mubr.f32.gmra.mxu0 %v1350
  %v1418 = vpop.f32.mrf.mxu0
  %v1419 = vadd.f32 0.0, %v1418
  %v1420 = vpop.f32.mrf.mxu0
  %1421 = vdwg.mxu0
  %v1422 = vlaneseq
  %v1423 = vshrl.u32 %v1422, 7
  %v1424 = vsub.s32 0, %v1423
  %v1425 = vrot.slane %v1419, %v1424
  %v1426 = vmul.f32 %v1197, %v1425
  %v1427 = vmul.f32 %v1198, %v1425
  %v1428 = vmul.f32 %v1199, %v1425
  %v1429 = vmul.f32 %v1200, %v1425
  %v1430 = vlaneseq
  %v1431 = vshrl.u32 %v1430, 7
  %v1432 = vsub.s32 1, %v1431
  %v1433 = vrot.slane %v1419, %v1432
  %v1434 = vadd.f32 %v1426, %v1433
  %v1435 = vadd.f32 %v1427, %v1433
  %v1436 = vadd.f32 %v1428, %v1433
  %v1437 = vadd.f32 %v1429, %v1433
  %v1438 = vmax.f32 %v1434, 0.0
  %v1439 = vmax.f32 %v1435, 0.0
  %v1440 = vmax.f32 %v1436, 0.0
  %v1441 = vmax.f32 %v1437, 0.0
  %1442 = vst [vmem:[%s13] sm:$0xff] %v1438
  %1443 = vst [vmem:[%s13 + $0x8] sm:$0xff] %v1439
  %1444 = vst [vmem:[%s13 + $0x10] sm:$0xff] %v1440
  %1445 = vst [vmem:[%s13 + $0x18] sm:$0xff] %v1441
  // Predicated region
  $region54: #{double_conv.1} parent=0 // pred_check
    _
  $region55: #{double_conv.1} parent=0 // pred_check_branch
    %1447 = sbr.rel (0) target = $region57
  $region56: #{double_conv.1} parent=0 // pred_region
    _
  $region57: #{double_conv.1} parent=0 // pred_fallthru
    _
  // Predicated region
  $region58: #{double_conv.1} parent=0 // pred_check
    _
  $region59: #{double_conv.1} parent=0 // pred_check_branch
    %1449 = sbr.rel (0) target = $region61
  $region60: #{double_conv.1} parent=0 // pred_region
    _
  $region61: #{double_conv.1} parent=0 // pred_fallthru
    _

</llo_original>
